<compile_context>
chip_gen: v6e
topology: v6e:2x2x1
jax: 0.10.0
libtpu: 0.0.40
codegen_flags: <defaults>
</compile_context>

<pallas_src>
import jax
import jax.numpy as jnp
from jax.experimental import pallas as pl
from jax.experimental.pallas import tpu as pltpu


def _dwconv_kernel(x_ref, top_ref, bot_ref, w_ref, b_ref, o_ref):
    # x_ref:   (1, Ht, W, Cb)  main rows of one (batch, H-tile, C-block)
    # top_ref: (1, 1,  W, Cb)  image row just above the tile (clamped at h=0)
    # bot_ref: (1, 1,  W, Cb)  image row just below the tile (clamped at h=H-1)
    # w_ref:   (9, Cb)         depthwise taps, row k = ky*3 + kx (compute dtype)
    # b_ref:   (1, Cb)         bias (f32)
    # o_ref:   (1, Ht, W, Cb)
    ht, width = x_ref.shape[1], x_ref.shape[2]
    cdt = x_ref.dtype
    f32 = jnp.float32

    h = pl.program_id(2)
    top_valid = (h > 0).astype(cdt)                       # 0 at the global top edge
    bot_valid = (h < pl.num_programs(2) - 1).astype(cdt)  # 0 at the global bottom edge

    xm = x_ref[0]                                         # (Ht, W, Cb)
    xt = top_ref[0] * top_valid                           # (1, W, Cb)
    xb = bot_ref[0] * bot_valid                           # (1, W, Cb)
    x_ext = jnp.concatenate([xt, xm, xb], axis=0)         # (Ht+2, W, Cb)

    # {0,1} column-boundary masks, shape (1, W, 1): broadcast over rows & lanes.
    col = jax.lax.broadcasted_iota(jnp.int32, (1, width, 1), 1)
    lmask = (col > 0).astype(cdt)
    rmask = (col < width - 1).astype(cdt)

    # Horizontal neighbours via sublane rolls (XLU) + one broadcast multiply each.
    left = pltpu.roll(x_ext, shift=1 % width, axis=1) * lmask             # x[.., w-1, :]
    right = pltpu.roll(x_ext, shift=(width - 1) % width, axis=1) * rmask  # x[.., w+1, :]

    w = w_ref[...]                                        # (9, Cb), compute dtype

    def hsum(ky):  # 1x3 horizontal correlation with kernel row `ky`
        return left * w[3 * ky + 0] + x_ext * w[3 * ky + 1] + right * w[3 * ky + 2]

    # out[l] = S0(l-1) + S1(l) + S2(l+1) + bias ;  x_ext row j == image row l = j-1.
    acc = hsum(1)[1:ht + 1].astype(f32) + b_ref[0]        # bias seeds the f32 acc
    acc = acc + hsum(0)[0:ht].astype(f32)
    acc = acc + hsum(2)[2:ht + 2].astype(f32)
    o_ref[0] = acc.astype(o_ref.dtype)


def _vmem_limit_bytes():
    phys = 64 * 1024 * 1024                      # conservative default (v7x-sized)
    try:
        info = pltpu.get_tpu_info()
        phys = int(getattr(info, "vmem_capacity_bytes", phys)) or phys
    except Exception:
        pass
    # ~48 MiB on v7x (64 MiB VMEM), ~96 MiB on v5e/v6e (128 MiB VMEM).
    return min(phys * 3 // 4, 96 * 1024 * 1024)


def _estimate_step_vmem(ht, width, cb, itemsize):
    rows_ext = ht + 2
    blk_in = rows_ext * width * cb * itemsize + 10 * cb * 4   # x tile + halos + taps/bias
    blk_out = ht * width * cb * itemsize
    temps = 6 * rows_ext * width * cb * 4                     # x_ext/left/right/hsum/acc (f32)
    return 2 * (blk_in + blk_out) + temps                     # x2: double-buffered pipeline


def _pick_tiles(H, width, c_pad, itemsize, budget):
    c_opts = [c for c in range(c_pad, 127, -128) if c_pad % c == 0] or [c_pad]
    h_opts = [d for d in range(H, 0, -1) if H % d == 0]
    for ht in h_opts:                            # prefer tall tiles (least halo re-read)
        for cb in c_opts:                        # then the widest lane-dense C block
            if _estimate_step_vmem(ht, width, cb, itemsize) <= budget:
                return cb, ht
    return c_opts[-1], 1                         # last resort


def dwconv_pallas(x, weight, bias, H, W, *, c_block=None, h_tile=None):
    """x: (B, N, C) with N == H*W. weight: (C, 1, 3, 3) (PyTorch layout). bias: (C,)."""
    B, N, C = x.shape
    assert N == H * W, "N must equal H * W"

    orig_dtype = x.dtype
    if x.dtype not in (jnp.float32, jnp.bfloat16):
        # TODO(synk): non-f32/bf16 inputs are computed in f32 and cast back.
        x = x.astype(jnp.float32)
    cdt = x.dtype                                 # compute dtype for the 9 tap multiplies

    # Lane-dense channels: pad C up to a multiple of 128 (beats masked vst.msk stores).
    c_pad = -(-C // 128) * 128
    if c_pad != C:
        x = jnp.pad(x, ((0, 0), (0, 0), (0, c_pad - C)))
        weight = jnp.pad(weight, ((0, c_pad - C), (0, 0), (0, 0), (0, 0)))
        bias = jnp.pad(bias, ((0, c_pad - C),))

    # (C,1,3,3) -> (9, C): row ky*3+kx holds the per-channel tap; pre-cast once on host.
    w_taps = jnp.transpose(weight[:, 0, :, :], (1, 2, 0)).reshape(9, c_pad).astype(cdt)
    b2d = bias.reshape(1, c_pad).astype(jnp.float32)

    x4 = x.reshape(B, H, W, c_pad)                # metadata-only reshape, no HBM copy

    vmem_limit = _vmem_limit_bytes()
    auto_cb, auto_ht = _pick_tiles(H, W, c_pad, jnp.dtype(cdt).itemsize,
                                   int(vmem_limit * 0.7))
    cb = c_block if c_block is not None else auto_cb
    ht = h_tile if h_tile is not None else auto_ht
    assert c_pad % cb == 0 and (cb % 128 == 0 or cb == c_pad)
    assert H % ht == 0

    n_cb, n_ht = c_pad // cb, H // ht
    if c_block is None and h_tile is None and B * n_cb * n_ht == 1 and H > 1:
        # v7x has two TensorCores: ensure a parallel grid axis has >= 2 steps
        # (splitting H keeps channel blocks maximal / lane-dense).
        ht = next(d for d in range(H - 1, 0, -1) if H % d == 0)
        n_ht = H // ht

    grid = (n_cb, B, n_ht)

    def x_main_map(c, b, h):
        return (b, h, 0, c)

    def x_top_map(c, b, h):                       # 1-row halo above the tile, clamped
        return (b, jnp.maximum(h * ht - 1, 0), 0, c)

    def x_bot_map(c, b, h):                       # 1-row halo below the tile, clamped
        return (b, jnp.minimum((h + 1) * ht, H - 1), 0, c)

    out4 = pl.pallas_call(
        _dwconv_kernel,
        out_shape=jax.ShapeDtypeStruct((B, H, W, c_pad), cdt),
        grid_spec=pltpu.PrefetchScalarGridSpec(
            num_scalar_prefetch=0,
            grid=grid,
            in_specs=[
                pl.BlockSpec((1, ht, W, cb), x_main_map),
                pl.BlockSpec((1, 1, W, cb), x_top_map),
                pl.BlockSpec((1, 1, W, cb), x_bot_map),
                pl.BlockSpec((9, cb), lambda c, b, h: (0, c)),
                pl.BlockSpec((1, cb), lambda c, b, h: (0, c)),
            ],
            out_specs=pl.BlockSpec((1, ht, W, cb), x_main_map),
        ),
        compiler_params=pltpu.CompilerParams(
            dimension_semantics=("parallel", "parallel", "parallel"),
            vmem_limit_bytes=int(vmem_limit),
        ),
    )(x4, x4, x4, w_taps, b2d)

    out = out4.reshape(B, N, c_pad)
    if c_pad != C:
        out = out[:, :, :C]
    return out.astype(orig_dtype)


def _reference(x, weight, bias, H, W):
    """Pure-JAX reference matching PyTorch nn.Conv2d(groups=C) semantics."""
    B, N, C = x.shape
    x_nchw = jnp.transpose(x, (0, 2, 1)).reshape(B, C, H, W).astype(jnp.float32)
    y = jax.lax.conv_general_dilated(
        x_nchw, weight.astype(jnp.float32),
        window_strides=(1, 1), padding=((1, 1), (1, 1)),
        dimension_numbers=("NCHW", "OIHW", "NCHW"),
        feature_group_count=C,
        precision=jax.lax.Precision.HIGHEST)
    y = y + bias.astype(jnp.float32).reshape(1, C, 1, 1)
    return jnp.transpose(y.reshape(B, C, N), (0, 2, 1))


if __name__ == "__main__":
    key = jax.random.PRNGKey(0)

    def run_case(B, C, Hsz, Wsz, dtype=jnp.float32, tol=1e-4, **kwargs):
        N = Hsz * Wsz
        k1, k2, k3 = jax.random.split(key, 3)
        x = jax.random.normal(k1, (B, N, C), dtype=jnp.float32).astype(dtype)
        # Deterministic synthetic params with PyTorch Conv2d shapes: (dim,1,3,3), (dim,)
        weight = (jax.random.normal(k2, (C, 1, 3, 3), dtype=jnp.float32) * 0.1).astype(dtype)
        bias = (jax.random.normal(k3, (C,), dtype=jnp.float32) * 0.1).astype(dtype)

        out = jax.block_until_ready(dwconv_pallas(x, weight, bias, Hsz, Wsz, **kwargs))
        ref = _reference(x.astype(jnp.float32), weight, bias, Hsz, Wsz)
        assert out.shape == (B, N, C)
        err = float(jnp.max(jnp.abs(out.astype(jnp.float32) - ref)))
        assert err <= tol, (
            f"max |err| {err} > {tol} for B={B} C={C} H={Hsz} W={Wsz} dtype={dtype}")

    run_case(2, 256, 16, 16)                                 # single spatial tile, lane-dense
    run_case(2, 256, 16, 16, c_block=128, h_tile=8)          # channel tiling + halo path
    run_case(1, 192, 8, 8)                                   # C padded to 256; >=2-step split
    run_case(2, 128, 16, 16, dtype=jnp.bfloat16, tol=3e-2)   # bf16 tap math, f32 accumulation

    print("KERNEL_OK")
</pallas_src>

<mosaic_0001>
module attributes {stable_mosaic.version = 11 : i64} {
  func.func @_dwconv_kernel(%arg0: i32, %arg1: i32, %arg2: i32, %arg3: memref<1x16x16x256xf32, #tpu.memory_space<vmem>>, %arg4: memref<1x1x16x256xf32, #tpu.memory_space<vmem>>, %arg5: memref<1x1x16x256xf32, #tpu.memory_space<vmem>>, %arg6: memref<9x256xf32, #tpu.memory_space<vmem>>, %arg7: memref<1x256xf32, #tpu.memory_space<vmem>>, %arg8: memref<1x16x16x256xf32, #tpu.memory_space<vmem>>) attributes {dimension_semantics = [#tpu.dimension_semantics<parallel>, #tpu.dimension_semantics<parallel>, #tpu.dimension_semantics<parallel>], iteration_bounds = array<i64: 1, 2, 1>, scalar_prefetch = 0 : i64, scratch_operands = 0 : i64, tpu.core_type = #tpu.core_type<tc>, window_params = [{transform_indices = @transform_0, window_bounds = array<i64: 1, 16, 16, 256>}, {transform_indices = @transform_1, window_bounds = array<i64: 1, 1, 16, 256>}, {transform_indices = @transform_2, window_bounds = array<i64: 1, 1, 16, 256>}, {transform_indices = @transform_3, window_bounds = array<i64: 9, 256>}, {transform_indices = @transform_4, window_bounds = array<i64: 1, 256>}, {transform_indices = @transform_5, window_bounds = array<i64: 1, 16, 16, 256>}]} {
    %c0_i32 = arith.constant 0 : i32
    %0 = arith.cmpi sgt, %arg2, %c0_i32 : i32
    %1 = arith.extui %0 : i1 to i32
    %2 = arith.sitofp %1 : i32 to f32
    %c0_i32_0 = arith.constant 0 : i32
    %3 = arith.cmpi slt, %arg2, %c0_i32_0 : i32
    %4 = arith.extui %3 : i1 to i32
    %5 = arith.sitofp %4 : i32 to f32
    %c0 = arith.constant 0 : index
    %c0_1 = arith.constant 0 : index
    %c0_2 = arith.constant 0 : index
    %c0_3 = arith.constant 0 : index
    %6 = vector.load %arg3[%c0, %c0_1, %c0_2, %c0_3] : memref<1x16x16x256xf32, #tpu.memory_space<vmem>>, vector<1x16x16x256xf32>
    %7 = vector.shape_cast %6 : vector<1x16x16x256xf32> to vector<16x16x256xf32>
    %c0_4 = arith.constant 0 : index
    %c0_5 = arith.constant 0 : index
    %c0_6 = arith.constant 0 : index
    %c0_7 = arith.constant 0 : index
    %8 = vector.load %arg4[%c0_4, %c0_5, %c0_6, %c0_7] : memref<1x1x16x256xf32, #tpu.memory_space<vmem>>, vector<1x1x16x256xf32>
    %9 = vector.shape_cast %8 : vector<1x1x16x256xf32> to vector<1x16x256xf32>
    %10 = vector.broadcast %2 : f32 to vector<1x16x256xf32>
    %11 = arith.mulf %9, %10 : vector<1x16x256xf32>
    %c0_8 = arith.constant 0 : index
    %c0_9 = arith.constant 0 : index
    %c0_10 = arith.constant 0 : index
    %c0_11 = arith.constant 0 : index
    %12 = vector.load %arg5[%c0_8, %c0_9, %c0_10, %c0_11] : memref<1x1x16x256xf32, #tpu.memory_space<vmem>>, vector<1x1x16x256xf32>
    %13 = vector.shape_cast %12 : vector<1x1x16x256xf32> to vector<1x16x256xf32>
    %14 = vector.broadcast %5 : f32 to vector<1x16x256xf32>
    %15 = arith.mulf %13, %14 : vector<1x16x256xf32>
    %16 = tpu.concatenate %11, %7, %15 in 0 : vector<1x16x256xf32>, vector<16x16x256xf32>, vector<1x16x256xf32> -> vector<18x16x256xf32>
    %17 = tpu.iota {dimensions = array<i32: 1>} : vector<1x16x1xi32>
    %c0_i32_12 = arith.constant 0 : i32
    %18 = vector.broadcast %c0_i32_12 : i32 to vector<1x16x1xi32>
    %19 = arith.cmpi sgt, %17, %18 : vector<1x16x1xi32>
    %20 = arith.extui %19 : vector<1x16x1xi1> to vector<1x16x1xi32>
    %21 = arith.sitofp %20 : vector<1x16x1xi32> to vector<1x16x1xf32>
    %c15_i32 = arith.constant 15 : i32
    %22 = vector.broadcast %c15_i32 : i32 to vector<1x16x1xi32>
    %23 = arith.cmpi slt, %17, %22 : vector<1x16x1xi32>
    %24 = arith.extui %23 : vector<1x16x1xi1> to vector<1x16x1xi32>
    %25 = arith.sitofp %24 : vector<1x16x1xi32> to vector<1x16x1xf32>
    %c1_i32 = arith.constant 1 : i32
    %26 = tpu.dynamic_rotate %16 by %c1_i32 dim 1 : vector<18x16x256xf32>, i32 -> vector<18x16x256xf32>
    %27 = vector.broadcast %21 : vector<1x16x1xf32> to vector<18x16x256xf32>
    %28 = arith.mulf %26, %27 : vector<18x16x256xf32>
    %c15_i32_13 = arith.constant 15 : i32
    %29 = tpu.dynamic_rotate %16 by %c15_i32_13 dim 1 : vector<18x16x256xf32>, i32 -> vector<18x16x256xf32>
    %30 = vector.broadcast %25 : vector<1x16x1xf32> to vector<18x16x256xf32>
    %31 = arith.mulf %29, %30 : vector<18x16x256xf32>
    %c0_14 = arith.constant 0 : index
    %c0_15 = arith.constant 0 : index
    %32 = vector.load %arg6[%c0_14, %c0_15] : memref<9x256xf32, #tpu.memory_space<vmem>>, vector<9x256xf32>
    %33 = vector.extract_strided_slice %32 {offsets = [3, 0], sizes = [1, 256], strides = [1, 1]} : vector<9x256xf32> to vector<1x256xf32>
    %34 = vector.shape_cast %33 : vector<1x256xf32> to vector<256xf32>
    %35 = vector.shape_cast %34 : vector<256xf32> to vector<1x1x256xf32>
    %36 = vector.broadcast %35 : vector<1x1x256xf32> to vector<18x16x256xf32>
    %37 = arith.mulf %28, %36 : vector<18x16x256xf32>
    %38 = vector.extract_strided_slice %32 {offsets = [4, 0], sizes = [1, 256], strides = [1, 1]} : vector<9x256xf32> to vector<1x256xf32>
    %39 = vector.shape_cast %38 : vector<1x256xf32> to vector<256xf32>
    %40 = vector.shape_cast %39 : vector<256xf32> to vector<1x1x256xf32>
    %41 = vector.broadcast %40 : vector<1x1x256xf32> to vector<18x16x256xf32>
    %42 = arith.mulf %16, %41 : vector<18x16x256xf32>
    %43 = arith.addf %37, %42 : vector<18x16x256xf32>
    %44 = vector.extract_strided_slice %32 {offsets = [5, 0], sizes = [1, 256], strides = [1, 1]} : vector<9x256xf32> to vector<1x256xf32>
    %45 = vector.shape_cast %44 : vector<1x256xf32> to vector<256xf32>
    %46 = vector.shape_cast %45 : vector<256xf32> to vector<1x1x256xf32>
    %47 = vector.broadcast %46 : vector<1x1x256xf32> to vector<18x16x256xf32>
    %48 = arith.mulf %31, %47 : vector<18x16x256xf32>
    %49 = arith.addf %43, %48 : vector<18x16x256xf32>
    %50 = vector.extract_strided_slice %49 {offsets = [1, 0, 0], sizes = [16, 16, 256], strides = [1, 1, 1]} : vector<18x16x256xf32> to vector<16x16x256xf32>
    %c0_16 = arith.constant 0 : index
    %c0_17 = arith.constant 0 : index
    %51 = vector.load %arg7[%c0_16, %c0_17] : memref<1x256xf32, #tpu.memory_space<vmem>>, vector<1x256xf32>
    %52 = vector.shape_cast %51 : vector<1x256xf32> to vector<256xf32>
    %53 = vector.shape_cast %52 : vector<256xf32> to vector<1x1x256xf32>
    %54 = vector.broadcast %53 : vector<1x1x256xf32> to vector<16x16x256xf32>
    %55 = arith.addf %50, %54 : vector<16x16x256xf32>
    %56 = vector.extract_strided_slice %32 {offsets = [0, 0], sizes = [1, 256], strides = [1, 1]} : vector<9x256xf32> to vector<1x256xf32>
    %57 = vector.shape_cast %56 : vector<1x256xf32> to vector<256xf32>
    %58 = vector.shape_cast %57 : vector<256xf32> to vector<1x1x256xf32>
    %59 = vector.broadcast %58 : vector<1x1x256xf32> to vector<18x16x256xf32>
    %60 = arith.mulf %28, %59 : vector<18x16x256xf32>
    %61 = vector.extract_strided_slice %32 {offsets = [1, 0], sizes = [1, 256], strides = [1, 1]} : vector<9x256xf32> to vector<1x256xf32>
    %62 = vector.shape_cast %61 : vector<1x256xf32> to vector<256xf32>
    %63 = vector.shape_cast %62 : vector<256xf32> to vector<1x1x256xf32>
    %64 = vector.broadcast %63 : vector<1x1x256xf32> to vector<18x16x256xf32>
    %65 = arith.mulf %16, %64 : vector<18x16x256xf32>
    %66 = arith.addf %60, %65 : vector<18x16x256xf32>
    %67 = vector.extract_strided_slice %32 {offsets = [2, 0], sizes = [1, 256], strides = [1, 1]} : vector<9x256xf32> to vector<1x256xf32>
    %68 = vector.shape_cast %67 : vector<1x256xf32> to vector<256xf32>
    %69 = vector.shape_cast %68 : vector<256xf32> to vector<1x1x256xf32>
    %70 = vector.broadcast %69 : vector<1x1x256xf32> to vector<18x16x256xf32>
    %71 = arith.mulf %31, %70 : vector<18x16x256xf32>
    %72 = arith.addf %66, %71 : vector<18x16x256xf32>
    %73 = vector.extract_strided_slice %72 {offsets = [0, 0, 0], sizes = [16, 16, 256], strides = [1, 1, 1]} : vector<18x16x256xf32> to vector<16x16x256xf32>
    %74 = arith.addf %55, %73 : vector<16x16x256xf32>
    %75 = vector.extract_strided_slice %32 {offsets = [6, 0], sizes = [1, 256], strides = [1, 1]} : vector<9x256xf32> to vector<1x256xf32>
    %76 = vector.shape_cast %75 : vector<1x256xf32> to vector<256xf32>
    %77 = vector.shape_cast %76 : vector<256xf32> to vector<1x1x256xf32>
    %78 = vector.broadcast %77 : vector<1x1x256xf32> to vector<18x16x256xf32>
    %79 = arith.mulf %28, %78 : vector<18x16x256xf32>
    %80 = vector.extract_strided_slice %32 {offsets = [7, 0], sizes = [1, 256], strides = [1, 1]} : vector<9x256xf32> to vector<1x256xf32>
    %81 = vector.shape_cast %80 : vector<1x256xf32> to vector<256xf32>
    %82 = vector.shape_cast %81 : vector<256xf32> to vector<1x1x256xf32>
    %83 = vector.broadcast %82 : vector<1x1x256xf32> to vector<18x16x256xf32>
    %84 = arith.mulf %16, %83 : vector<18x16x256xf32>
    %85 = arith.addf %79, %84 : vector<18x16x256xf32>
    %86 = vector.extract_strided_slice %32 {offsets = [8, 0], sizes = [1, 256], strides = [1, 1]} : vector<9x256xf32> to vector<1x256xf32>
    %87 = vector.shape_cast %86 : vector<1x256xf32> to vector<256xf32>
    %88 = vector.shape_cast %87 : vector<256xf32> to vector<1x1x256xf32>
    %89 = vector.broadcast %88 : vector<1x1x256xf32> to vector<18x16x256xf32>
    %90 = arith.mulf %31, %89 : vector<18x16x256xf32>
    %91 = arith.addf %85, %90 : vector<18x16x256xf32>
    %92 = vector.extract_strided_slice %91 {offsets = [2, 0, 0], sizes = [16, 16, 256], strides = [1, 1, 1]} : vector<18x16x256xf32> to vector<16x16x256xf32>
    %93 = arith.addf %74, %92 : vector<16x16x256xf32>
    %c0_18 = arith.constant 0 : index
    %c0_19 = arith.constant 0 : index
    %c0_20 = arith.constant 0 : index
    %c0_21 = arith.constant 0 : index
    %94 = vector.load %arg8[%c0_18, %c0_19, %c0_20, %c0_21] : memref<1x16x16x256xf32, #tpu.memory_space<vmem>>, vector<1x16x16x256xf32>
    %95 = vector.shape_cast %94 : vector<1x16x16x256xf32> to vector<16x16x256xf32>
    %96 = vector.shape_cast %93 : vector<16x16x256xf32> to vector<1x16x16x256xf32>
    tpu.vector_store %arg8[%c0_18, %c0_19, %c0_20, %c0_21], %96 {strides = array<i32>} : memref<1x16x16x256xf32, #tpu.memory_space<vmem>>, vector<1x16x16x256xf32>,
    return
  }
  func.func @transform_0(%arg0: i32, %arg1: i32, %arg2: i32) -> (i32, i32, i32, i32) {
    %c0_i32 = arith.constant 0 : i32
    %c0_i32_0 = arith.constant 0 : i32
    return %arg1, %arg2, %c0_i32, %arg0 : i32, i32, i32, i32
  }
  func.func @transform_1(%arg0: i32, %arg1: i32, %arg2: i32) -> (i32, i32, i32, i32) {
    %c16_i32 = arith.constant 16 : i32
    %0 = arith.muli %arg2, %c16_i32 : i32
    %c1_i32 = arith.constant 1 : i32
    %1 = arith.subi %0, %c1_i32 : i32
    %c0_i32 = arith.constant 0 : i32
    %2 = arith.maxsi %1, %c0_i32 : i32
    %c0_i32_0 = arith.constant 0 : i32
    %c0_i32_1 = arith.constant 0 : i32
    return %arg1, %2, %c0_i32_0, %arg0 : i32, i32, i32, i32
  }
  func.func @transform_2(%arg0: i32, %arg1: i32, %arg2: i32) -> (i32, i32, i32, i32) {
    %c1_i32 = arith.constant 1 : i32
    %0 = arith.addi %arg2, %c1_i32 : i32
    %c16_i32 = arith.constant 16 : i32
    %1 = arith.muli %0, %c16_i32 : i32
    %c15_i32 = arith.constant 15 : i32
    %2 = arith.minsi %1, %c15_i32 : i32
    %c0_i32 = arith.constant 0 : i32
    %c0_i32_0 = arith.constant 0 : i32
    return %arg1, %2, %c0_i32, %arg0 : i32, i32, i32, i32
  }
  func.func @transform_3(%arg0: i32, %arg1: i32, %arg2: i32) -> (i32, i32) {
    %c0_i32 = arith.constant 0 : i32
    %c0_i32_0 = arith.constant 0 : i32
    return %c0_i32, %arg0 : i32, i32
  }
  func.func @transform_4(%arg0: i32, %arg1: i32, %arg2: i32) -> (i32, i32) {
    %c0_i32 = arith.constant 0 : i32
    %c0_i32_0 = arith.constant 0 : i32
    return %c0_i32, %arg0 : i32, i32
  }
  func.func @transform_5(%arg0: i32, %arg1: i32, %arg2: i32) -> (i32, i32, i32, i32) {
    %c0_i32 = arith.constant 0 : i32
    %c0_i32_0 = arith.constant 0 : i32
    return %arg1, %arg2, %c0_i32, %arg0 : i32, i32, i32, i32
  }
}

</mosaic_0001>

<llo_original>
// kernel: tpu_custom_call.1
$region0: #{tpu_custom_call.1}
  #allocation0 [shape = 'u32[]', space=smem, size = 0x4, offset = 0x4, fixed_abs, tag = 'smem constant byte address 0x4 - core index']
  #allocation1 [shape = 'u32[144,128]{1,0:T(1,128)}', space=vmem, size = 0x12000, scoped, tag = 'internal scratch']
  %s0 = inlined_call_operand.hbm [shape: f32[2,16,16,256], index: 0, kind: input, shape index: {}]
  %s1 = inlined_call_operand.hbm [shape: f32[2,16,16,256], index: 1, kind: input, shape index: {}]
  %s2 = inlined_call_operand.hbm [shape: f32[2,16,16,256], index: 2, kind: input, shape index: {}]
  %s3 = inlined_call_operand.hbm [shape: f32[9,256], index: 3, kind: input, shape index: {}]
  %s4 = inlined_call_operand.vmem [shape: f32[1,256], index: 4, kind: input, shape index: {}]
  %s5 = inlined_call_operand.hbm [shape: f32[2,16,16,256], index: 5, kind: output, shape index: {}]
  %s6 = sld [smem:[#allocation0]]
  $region69: #{tpu_custom_call.1} parent=0
    _
  %s8 = ssub.s32 1, %s6
  %s9 = scalar_select 0, %s8, %s6
  $region1: #{tpu_custom_call.1} parent=0
    #allocation2 [shape = 'u8[524288]{0}', space=vmem, size = 0x80000, scoped, tag = 'input window, operand 0']
    #allocation3 [shape = 's32[2]{0}', space=sflag, size = 0x8, scoped, tag = 'scoped memory for tpu_custom_call.1']
    #allocation4 [shape = 's32[2]{0}', space=sflag, size = 0x8, scoped, tag = 'scoped memory for tpu_custom_call.1']
    #allocation5 [shape = 'u8[32768]{0}', space=vmem, size = 0x8000, scoped, tag = 'input window, operand 1']
    #allocation6 [shape = 's32[2]{0}', space=sflag, size = 0x8, scoped, tag = 'scoped memory for tpu_custom_call.1']
    #allocation7 [shape = 'u8[32768]{0}', space=vmem, size = 0x8000, scoped, tag = 'input window, operand 2']
    #allocation8 [shape = 'u8[16384]{0}', space=vmem, size = 0x4000, scoped, tag = 'input window, operand 3, single buffered']
    #allocation9 [shape = 's32[1]{0}', space=sflag, size = 0x4, scoped, tag = 'scoped memory for tpu_custom_call.1']
    #allocation10 [shape = 'u8[524288]{0}', space=vmem, size = 0x80000, scoped, tag = 'output window, operand 0']
    %10 = vsyncpa [#allocation3], 0
    %s11 = scalar_lea.sflag [#allocation3], 1
    %12 = vsyncpa %s11, 0
    %13 = vsyncpa [#allocation6], 0
    %s14 = scalar_lea.sflag [#allocation6], 1
    %15 = vsyncpa %s14, 0
    %16 = vsyncpa [#allocation9], 0
    %17 = vsyncpa [#allocation4], 0
    %s18 = scalar_lea.sflag [#allocation4], 1
    %19 = vsyncpa %s18, 0
    loop: start=0, step=1, limit=4
    $region2: #{tpu_custom_call.1} parent=1 // loop_pre_header
      _
    $region3: #{tpu_custom_call.1} parent=1 // loop_header
      %s21 = sphi 0, %s25
      %p22 = scmp.ge.s32.totalorder %s21, 4
      %s28 = sphi 0, %s47
      %s29 = sphi 0, %s43
      %s30 = sphi 0, %s39
      %s31 = sphi 0, %s28
      %s32 = sphi 0, %s29
      %s33 = sphi 0, %s30
      %s34 = sphi 0, %s31
      %s35 = sphi 0, %s32
      %s36 = sphi 0, %s33
      %s54 = sphi 0, %s56
      %s57 = sphi 0, %s54
      %s58 = sphi 0, %s57
      %s74 = sphi 0, %s58
      %s92 = sphi 0, %s94
      %s95 = sphi 0, %s92
      %s96 = sphi 0, %s95
      %s112 = sphi 0, %s96
      %s130 = sphi 0, %s132
      %s133 = sphi 0, %s130
      %s134 = sphi 0, %s133
      %s150 = sphi 0, %s134
      %s156 = sphi 0, %s158
      %s159 = sphi 0, %s156
      %s160 = sphi 0, %s159
      %s176 = sphi 0, %s160
      %s182 = sphi 0, %s184
      %s185 = sphi 0, %s182
      %s186 = sphi 0, %s185
      %s202 = sphi 0, %s186
      %s212 = sphi 0, %s214
      %s215 = sphi 0, %s212
      %s216 = sphi 0, %s215
      %s232 = sphi 0, %s216
    $region4: #{tpu_custom_call.1} parent=1 // loop_header_branch
      %24 = sbr.rel (%p22) target = $region8
    $region5: #{tpu_custom_call.1} parent=1 // loop_body
      %s26 = ssub.s32 %s21, 1
      %s27 = ssub.s32 %s21, 2
      %s37 = sadd.s32 1, %s30
      %p38 = scmp.ge.s32.totalorder %s37, 1
      %s39 = scalar_select %p38, 0, %s37
      %s40 = sadd.s32 1, %s29
      %s41 = scalar_select %p38, %s40, %s29
      %p42 = scmp.ge.s32.totalorder %s41, 2
      %s43 = scalar_select %p42, 0, %s41
      %s44 = sadd.s32 1, %s28
      %s45 = scalar_select %p42, %s44, %s28
      %p46 = scmp.ge.s32.totalorder %s45, 1
      %s47 = scalar_select %p46, 0, %s45
      %s48 = ssub.s32 %s29, %s43
      %s49 = ssub.s32 %s30, %s39
      %s50 = sor.u32 %s48, %s49
      %s51 = ssub.s32 %s28, %s47
      %s52 = sor.u32 %s50, %s51
      %p53 = scmp.eq.s32.totalorder %s52, 0
      %s55 = sadd.s32 %s54, 1
      %s56 = scalar_select %p53, %s54, %s55
      %p59 = pneg %p53
      %p60 = scmp.eq.s32.totalorder %s21, 1
      %p61 = por %p59, %p60
      %p62 = scmp.ne.s32.totalorder %s54, %s57
      %p63 = scmp.eq.s32.totalorder %s21, 0
      %p64 = por %p62, %p63
      %p65 = scmp.ne.s32.totalorder %s54, %s57
      %p66 = scmp.eq.s32.totalorder %s26, 1
      %p67 = por %p65, %p66
      %p68 = scmp.ne.s32.totalorder %s57, %s58
      %p69 = scmp.eq.s32.totalorder %s26, 0
      %p70 = por %p68, %p69
      %p71 = scmp.ne.s32.totalorder %s57, %s58
      %p72 = scmp.eq.s32.totalorder %s27, 1
      %p73 = por %p71, %p72
      %p75 = scmp.ne.s32.totalorder %s58, %s74
      %p76 = scmp.eq.s32.totalorder %s27, 0
      %p77 = por %p75, %p76
      %s78 = smul.u32 %s30, 16
      %s79 = ssub.s32 %s78, 1
      %p80 = scmp.gt.s32.totalorder %s79, 0
      %s81 = scalar_select %p80, %s79, 0
      %s82 = smul.u32 %s39, 16
      %s83 = ssub.s32 %s82, 1
      %p84 = scmp.gt.s32.totalorder %s83, 0
      %s85 = scalar_select %p84, %s83, 0
      %s86 = ssub.s32 %s29, %s43
      %s87 = ssub.s32 %s81, %s85
      %s88 = sor.u32 %s86, %s87
      %s89 = ssub.s32 %s28, %s47
      %s90 = sor.u32 %s88, %s89
      %p91 = scmp.eq.s32.totalorder %s90, 0
      %s93 = sadd.s32 %s92, 1
      %s94 = scalar_select %p91, %s92, %s93
      %p97 = pneg %p91
      %p98 = scmp.eq.s32.totalorder %s21, 1
      %p99 = por %p97, %p98
      %p100 = scmp.ne.s32.totalorder %s92, %s95
      %p101 = scmp.eq.s32.totalorder %s21, 0
      %p102 = por %p100, %p101
      %p103 = scmp.ne.s32.totalorder %s92, %s95
      %p104 = scmp.eq.s32.totalorder %s26, 1
      %p105 = por %p103, %p104
      %p106 = scmp.ne.s32.totalorder %s95, %s96
      %p107 = scmp.eq.s32.totalorder %s26, 0
      %p108 = por %p106, %p107
      %p109 = scmp.ne.s32.totalorder %s95, %s96
      %p110 = scmp.eq.s32.totalorder %s27, 1
      %p111 = por %p109, %p110
      %p113 = scmp.ne.s32.totalorder %s96, %s112
      %p114 = scmp.eq.s32.totalorder %s27, 0
      %p115 = por %p113, %p114
      %s116 = sadd.s32 %s30, 1
      %s117 = smul.u32 %s116, 16
      %p118 = scmp.lt.s32.totalorder %s117, 15
      %s119 = scalar_select %p118, %s117, 15
      %s120 = sadd.s32 %s39, 1
      %s121 = smul.u32 %s120, 16
      %p122 = scmp.lt.s32.totalorder %s121, 15
      %s123 = scalar_select %p122, %s121, 15
      %s124 = ssub.s32 %s29, %s43
      %s125 = ssub.s32 %s119, %s123
      %s126 = sor.u32 %s124, %s125
      %s127 = ssub.s32 %s28, %s47
      %s128 = sor.u32 %s126, %s127
      %p129 = scmp.eq.s32.totalorder %s128, 0
      %s131 = sadd.s32 %s130, 1
      %s132 = scalar_select %p129, %s130, %s131
      %p135 = pneg %p129
      %p136 = scmp.eq.s32.totalorder %s21, 1
      %p137 = por %p135, %p136
      %p138 = scmp.ne.s32.totalorder %s130, %s133
      %p139 = scmp.eq.s32.totalorder %s21, 0
      %p140 = por %p138, %p139
      %p141 = scmp.ne.s32.totalorder %s130, %s133
      %p142 = scmp.eq.s32.totalorder %s26, 1
      %p143 = por %p141, %p142
      %p144 = scmp.ne.s32.totalorder %s133, %s134
      %p145 = scmp.eq.s32.totalorder %s26, 0
      %p146 = por %p144, %p145
      %p147 = scmp.ne.s32.totalorder %s133, %s134
      %p148 = scmp.eq.s32.totalorder %s27, 1
      %p149 = por %p147, %p148
      %p151 = scmp.ne.s32.totalorder %s134, %s150
      %p152 = scmp.eq.s32.totalorder %s27, 0
      %p153 = por %p151, %p152
      %s154 = ssub.s32 %s28, %s47
      %p155 = scmp.eq.s32.totalorder %s154, 0
      %s157 = sadd.s32 %s156, 1
      %s158 = scalar_select %p155, %s156, %s157
      %p161 = pneg %p155
      %p162 = scmp.eq.s32.totalorder %s21, 1
      %p163 = por %p161, %p162
      %p164 = scmp.ne.s32.totalorder %s156, %s159
      %p165 = scmp.eq.s32.totalorder %s21, 0
      %p166 = por %p164, %p165
      %p167 = scmp.ne.s32.totalorder %s156, %s159
      %p168 = scmp.eq.s32.totalorder %s26, 1
      %p169 = por %p167, %p168
      %p170 = scmp.ne.s32.totalorder %s159, %s160
      %p171 = scmp.eq.s32.totalorder %s26, 0
      %p172 = por %p170, %p171
      %p173 = scmp.ne.s32.totalorder %s159, %s160
      %p174 = scmp.eq.s32.totalorder %s27, 1
      %p175 = por %p173, %p174
      %p177 = scmp.ne.s32.totalorder %s160, %s176
      %p178 = scmp.eq.s32.totalorder %s27, 0
      %p179 = por %p177, %p178
      %s180 = ssub.s32 %s28, %s47
      %p181 = scmp.eq.s32.totalorder %s180, 0
      %s183 = sadd.s32 %s182, 1
      %s184 = scalar_select %p181, %s182, %s183
      %p187 = pneg %p181
      %p188 = scmp.eq.s32.totalorder %s21, 1
      %p189 = por %p187, %p188
      %p190 = scmp.ne.s32.totalorder %s182, %s185
      %p191 = scmp.eq.s32.totalorder %s21, 0
      %p192 = por %p190, %p191
      %p193 = scmp.ne.s32.totalorder %s182, %s185
      %p194 = scmp.eq.s32.totalorder %s26, 1
      %p195 = por %p193, %p194
      %p196 = scmp.ne.s32.totalorder %s185, %s186
      %p197 = scmp.eq.s32.totalorder %s26, 0
      %p198 = por %p196, %p197
      %p199 = scmp.ne.s32.totalorder %s185, %s186
      %p200 = scmp.eq.s32.totalorder %s27, 1
      %p201 = por %p199, %p200
      %p203 = scmp.ne.s32.totalorder %s186, %s202
      %p204 = scmp.eq.s32.totalorder %s27, 0
      %p205 = por %p203, %p204
      %s206 = ssub.s32 %s29, %s43
      %s207 = ssub.s32 %s30, %s39
      %s208 = sor.u32 %s206, %s207
      %s209 = ssub.s32 %s28, %s47
      %s210 = sor.u32 %s208, %s209
      %p211 = scmp.eq.s32.totalorder %s210, 0
      %s213 = sadd.s32 %s212, 1
      %s214 = scalar_select %p211, %s212, %s213
      %p217 = pneg %p211
      %p218 = scmp.eq.s32.totalorder %s21, 1
      %p219 = por %p217, %p218
      %p220 = scmp.ne.s32.totalorder %s212, %s215
      %p221 = scmp.eq.s32.totalorder %s21, 0
      %p222 = por %p220, %p221
      %p223 = scmp.ne.s32.totalorder %s212, %s215
      %p224 = scmp.eq.s32.totalorder %s26, 1
      %p225 = por %p223, %p224
      %p226 = scmp.ne.s32.totalorder %s215, %s216
      %p227 = scmp.eq.s32.totalorder %s26, 0
      %p228 = por %p226, %p227
      %p229 = scmp.ne.s32.totalorder %s215, %s216
      %p230 = scmp.eq.s32.totalorder %s27, 1
      %p231 = por %p229, %p230
      %p233 = scmp.ne.s32.totalorder %s216, %s232
      %p234 = scmp.eq.s32.totalorder %s27, 0
      %p235 = por %p233, %p234
      %p236 = scmp.le.s32.totalorder 1, %s21
      %p237 = scmp.lt.s32.totalorder %s21, 3
      %p238 = pnand %p236, %p237
      %p239 = pneg %p238
      // Predicated region
      $region9: #{tpu_custom_call.1} parent=5 // pred_check
        _
      $region10: #{tpu_custom_call.1} parent=5 // pred_check_branch
        %241 = sbr.rel (%p238) target = $region12
      $region11: #{tpu_custom_call.1} parent=5 // pred_region
        %s242 = ssub.s32 %s21, 1
        // Predicated region
        $region13: #{tpu_custom_call.1} parent=11 // pred_check
          %p243 = pneg %p172
        $region14: #{tpu_custom_call.1} parent=11 // pred_check_branch
          %245 = sbr.rel (%p243) target = $region16
        $region15: #{tpu_custom_call.1} parent=11 // pred_region
          %s246 = smul.u32 2, %s31
          %s248 = ssub.s32 512, 512
          %249 = vsyncadd [#allocation9], %s248
          %s250 = smul.addr %s246, 128
          %s251 = scalar_lea.hbm %s3, %s250
          %s252 = sshll.u32 [#allocation8], 4
          %s253 = int_to_ptr.vmem [resolvable:$true] %s252
          %258 = dma.hbm_to_vmem [thread:$0]  %s251, 512, %s253, [#allocation9], 256, 256, 16
        $region16: #{tpu_custom_call.1} parent=11 // pred_fallthru
          _
        // Predicated region
        $region17: #{tpu_custom_call.1} parent=11 // pred_check
          %p259 = pneg %p198
        $region18: #{tpu_custom_call.1} parent=11 // pred_check_branch
          %261 = sbr.rel (%p259) target = $region20
        $region19: #{tpu_custom_call.1} parent=11 // pred_region
          %s262 = smul.u32 2, %s31
          %p263 = scmp.lt.s32.totalorder %s262, 1
          %s264 = scalar_select %p263, %s262, 1
          %s265 = scalar_lea.vmem %s4, %s264
          %s266 = smul.u32 2, %s31
        $region20: #{tpu_custom_call.1} parent=11 // pred_fallthru
          _
      $region12: #{tpu_custom_call.1} parent=5 // pred_fallthru
        _
      %p267 = scmp.lt.s32.totalorder %s21, 2
      // Predicated region
      $region21: #{tpu_custom_call.1} parent=5 // pred_check
        %p268 = pneg %p267
      $region22: #{tpu_custom_call.1} parent=5 // pred_check_branch
        %270 = sbr.rel (%p268) target = $region24
      $region23: #{tpu_custom_call.1} parent=5 // pred_region
        // Predicated region
        $region25: #{tpu_custom_call.1} parent=23 // pred_check
          %p271 = pneg %p64
        $region26: #{tpu_custom_call.1} parent=23 // pred_check_branch
          %273 = sbr.rel (%p271) target = $region28
        $region27: #{tpu_custom_call.1} parent=23 // pred_region
          %s274 = sand.u32 %s54, 1
          %s275 = scalar_lea.sflag [#allocation3], %s274
          %s276 = sand.u32 %s54, 1
          %s277 = smul.addr %s276, 512
          %s278 = scalar_lea.vmem [#allocation2], %s277
          %s279 = smul.u32 16, %s30
          %s280 = smul.u32 2, %s28
          %s282 = ssub.s32 8192, 8192
          %283 = vsyncadd %s275, %s282
          %s284 = smul.addr %s279, 4
          %s285 = sadd.s32 %s280, %s284
          %s286 = smul.addr %s29, 64
          %s287 = sadd.s32 %s285, %s286
          %s288 = smul.addr %s287, 128
          %s289 = scalar_lea.hbm %s0, %s288
          %s290 = sshll.u32 %s278, 4
          %s291 = int_to_ptr.vmem [resolvable:$true] %s290
          %296 = dma.hbm_to_vmem [thread:$0]  %s289, 8192, %s291, %s275, 256, 256, 16
        $region28: #{tpu_custom_call.1} parent=23 // pred_fallthru
          _
        // Predicated region
        $region29: #{tpu_custom_call.1} parent=23 // pred_check
          %p297 = pneg %p102
        $region30: #{tpu_custom_call.1} parent=23 // pred_check_branch
          %299 = sbr.rel (%p297) target = $region32
        $region31: #{tpu_custom_call.1} parent=23 // pred_region
          %s300 = sand.u32 %s21, 1
          %s301 = scalar_lea.sflag [#allocation6], %s300
          %s302 = sand.u32 %s92, 1
          %s303 = smul.addr %s302, 32
          %s304 = scalar_lea.vmem [#allocation5], %s303
          %s305 = smul.u32 %s30, 16
          %s306 = ssub.s32 %s305, 1
          %p307 = scmp.gt.s32.totalorder %s306, 0
          %s308 = scalar_select %p307, %s306, 0
          %s309 = smul.u32 2, %s28
          %s311 = ssub.s32 512, 512
          %312 = vsyncadd %s301, %s311
          %s313 = smul.addr %s308, 4
          %s314 = sadd.s32 %s309, %s313
          %s315 = smul.addr %s29, 64
          %s316 = sadd.s32 %s314, %s315
          %s317 = smul.addr %s316, 128
          %s318 = scalar_lea.hbm %s1, %s317
          %s319 = sshll.u32 %s304, 4
          %s320 = int_to_ptr.vmem [resolvable:$true] %s319
          %325 = dma.hbm_to_vmem [thread:$0]  %s318, 512, %s320, %s301, 256, 256, 16
        $region32: #{tpu_custom_call.1} parent=23 // pred_fallthru
          _
        // Predicated region
        $region33: #{tpu_custom_call.1} parent=23 // pred_check
          %p326 = pneg %p140
        $region34: #{tpu_custom_call.1} parent=23 // pred_check_branch
          %328 = sbr.rel (%p326) target = $region36
        $region35: #{tpu_custom_call.1} parent=23 // pred_region
          %s329 = sand.u32 %s21, 1
          %s330 = scalar_lea.sflag [#allocation6], %s329
          %s331 = sand.u32 %s130, 1
          %s332 = smul.addr %s331, 32
          %s333 = scalar_lea.vmem [#allocation7], %s332
          %s334 = sadd.s32 %s30, 1
          %s335 = smul.u32 %s334, 16
          %p336 = scmp.lt.s32.totalorder %s335, 15
          %s337 = scalar_select %p336, %s335, 15
          %s338 = smul.u32 2, %s28
          %s340 = ssub.s32 512, 512
          %341 = vsyncadd %s330, %s340
          %s342 = smul.addr %s337, 4
          %s343 = sadd.s32 %s338, %s342
          %s344 = smul.addr %s29, 64
          %s345 = sadd.s32 %s343, %s344
          %s346 = smul.addr %s345, 128
          %s347 = scalar_lea.hbm %s2, %s346
          %s348 = sshll.u32 %s333, 4
          %s349 = int_to_ptr.vmem [resolvable:$true] %s348
          %354 = dma.hbm_to_vmem [thread:$0]  %s347, 512, %s349, %s330, 256, 256, 16
        $region36: #{tpu_custom_call.1} parent=23 // pred_fallthru
          _
      $region24: #{tpu_custom_call.1} parent=5 // pred_fallthru
        _
      %p355 = scmp.le.s32.totalorder 1, %s21
      %p356 = scmp.lt.s32.totalorder %s21, 3
      %p357 = pnand %p355, %p356
      %p358 = pneg %p357
      // Predicated region
      $region37: #{tpu_custom_call.1} parent=5 // pred_check
        _
      $region38: #{tpu_custom_call.1} parent=5 // pred_check_branch
        %360 = sbr.rel (%p357) target = $region40
      $region39: #{tpu_custom_call.1} parent=5 // pred_region
        %s361 = ssub.s32 %s21, 1
        %s362 = sand.u32 %s57, 1
        %s363 = scalar_lea.sflag [#allocation3], %s362
        %s364 = sand.u32 %s57, 1
        %s365 = smul.addr %s364, 512
        %s366 = scalar_lea.vmem [#allocation2], %s365
        // Predicated region
        $region41: #{tpu_custom_call.1} parent=39 // pred_check
          %p367 = pneg %p70
        $region42: #{tpu_custom_call.1} parent=39 // pred_check_branch
          %369 = sbr.rel (%p367) target = $region44
        $region43: #{tpu_custom_call.1} parent=39 // pred_region
          %370 = dma.done %s363, 8192
        $region44: #{tpu_custom_call.1} parent=39 // pred_fallthru
          _
        %s371 = sand.u32 %s26, 1
        %s372 = scalar_lea.sflag [#allocation6], %s371
        %s373 = sand.u32 %s95, 1
        %s374 = smul.addr %s373, 32
        %s375 = scalar_lea.vmem [#allocation5], %s374
        // Predicated region
        $region45: #{tpu_custom_call.1} parent=39 // pred_check
          %p376 = pneg %p108
        $region46: #{tpu_custom_call.1} parent=39 // pred_check_branch
          %378 = sbr.rel (%p376) target = $region48
        $region47: #{tpu_custom_call.1} parent=39 // pred_region
          %379 = dma.done %s372, 512
        $region48: #{tpu_custom_call.1} parent=39 // pred_fallthru
          _
        %s380 = sand.u32 %s26, 1
        %s381 = scalar_lea.sflag [#allocation6], %s380
        %s382 = sand.u32 %s133, 1
        %s383 = smul.addr %s382, 32
        %s384 = scalar_lea.vmem [#allocation7], %s383
        // Predicated region
        $region49: #{tpu_custom_call.1} parent=39 // pred_check
          %p385 = pneg %p146
        $region50: #{tpu_custom_call.1} parent=39 // pred_check_branch
          %387 = sbr.rel (%p385) target = $region52
        $region51: #{tpu_custom_call.1} parent=39 // pred_region
          %388 = dma.done %s381, 512
        $region52: #{tpu_custom_call.1} parent=39 // pred_fallthru
          _
        // Predicated region
        $region53: #{tpu_custom_call.1} parent=39 // pred_check
          %p389 = pneg %p172
        $region54: #{tpu_custom_call.1} parent=39 // pred_check_branch
          %391 = sbr.rel (%p389) target = $region56
        $region55: #{tpu_custom_call.1} parent=39 // pred_region
          %392 = dma.done [#allocation9], 512
        $region56: #{tpu_custom_call.1} parent=39 // pred_fallthru
          _
        %s393 = sand.u32 %s57, 1
        %s394 = scalar_lea.sflag [#allocation3], %s393
        %s395 = sand.u32 %s57, 1
        %s396 = smul.addr %s395, 512
        %s397 = scalar_lea.vmem [#allocation2], %s396
        %p398 = pneg %p70
        %p399 = pneg %p67
        %s400 = sand.u32 %s26, 1
        %s401 = scalar_lea.sflag [#allocation6], %s400
        %s402 = sand.u32 %s95, 1
        %s403 = smul.addr %s402, 32
        %s404 = scalar_lea.vmem [#allocation5], %s403
        %p405 = pneg %p108
        %p406 = pneg %p105
        %s407 = sand.u32 %s26, 1
        %s408 = scalar_lea.sflag [#allocation6], %s407
        %s409 = sand.u32 %s133, 1
        %s410 = smul.addr %s409, 32
        %s411 = scalar_lea.vmem [#allocation7], %s410
        %p412 = pneg %p146
        %p413 = pneg %p143
        %p414 = pneg %p172
        %p415 = pneg %p169
        %s416 = smul.u32 2, %s31
        %p417 = scmp.lt.s32.totalorder %s416, 1
        %s418 = scalar_select %p417, %s416, 1
        %s419 = scalar_lea.vmem %s4, %s418
        %p420 = pneg %p198
        %p421 = pneg %p195
        %p422 = pneg %p228
        %p423 = pneg %p225
        %s424 = sand.u32 %s215, 1
        %s425 = scalar_lea.sflag [#allocation4], %s424
        %s426 = sand.u32 %s215, 1
        %s427 = smul.addr %s426, 512
        %s428 = scalar_lea.vmem [#allocation10], %s427
        %s429 = smul.u32 16, %s33
        %s430 = smul.u32 2, %s31
        %s431 = smul.u32 %s33, 16
        %s432 = ssub.s32 %s431, 1
        %p433 = scmp.gt.s32.totalorder %s432, 0
        %s434 = scalar_select %p433, %s432, 0
        %s435 = smul.u32 2, %s31
        %s436 = sadd.s32 %s33, 1
        %s437 = smul.u32 %s436, 16
        %p438 = scmp.lt.s32.totalorder %s437, 15
        %s439 = scalar_select %p438, %s437, 15
        %s440 = smul.u32 2, %s31
        %s441 = smul.u32 2, %s31
        %s442 = smul.u32 2, %s31
        %p443 = scmp.lt.s32.totalorder %s442, 1
        %s444 = scalar_select %p443, %s442, 1
        %s445 = scalar_lea.vmem %s4, %s444
        %s446 = smul.u32 2, %s31
        %s447 = smul.u32 16, %s33
        %s448 = smul.u32 2, %s31
        %p449 = scmp.gt.s32.totalorder %s33, 0
        %s450 = scalar_select %p449, 1, 0
        %s451 = scvt.s32.f32 %s450
        %p452 = scmp.lt.s32.totalorder %s33, 0
        %s453 = scalar_select %p452, 1, 0
        %s454 = scvt.s32.f32 %s453
        %v455 = vld [vmem:[%s366] sm:$0xff]
        %v456 = vld [vmem:[%s366 + $0x8] sm:$0xff]
        %v457 = vld [vmem:[%s366 + $0x10] sm:$0xff]
        %v458 = vld [vmem:[%s366 + $0x18] sm:$0xff]
        %v459 = vld [vmem:[%s366 + $0x20] sm:$0xff]
        %v460 = vld [vmem:[%s366 + $0x28] sm:$0xff]
        %v461 = vld [vmem:[%s366 + $0x30] sm:$0xff]
        %v462 = vld [vmem:[%s366 + $0x38] sm:$0xff]
        %v463 = vld [vmem:[%s366 + $0x40] sm:$0xff]
        %v464 = vld [vmem:[%s366 + $0x48] sm:$0xff]
        %v465 = vld [vmem:[%s366 + $0x50] sm:$0xff]
        %v466 = vld [vmem:[%s366 + $0x58] sm:$0xff]
        %v467 = vld [vmem:[%s366 + $0x60] sm:$0xff]
        %v468 = vld [vmem:[%s366 + $0x68] sm:$0xff]
        %v469 = vld [vmem:[%s366 + $0x70] sm:$0xff]
        %v470 = vld [vmem:[%s366 + $0x78] sm:$0xff]
        %v471 = vld [vmem:[%s366 + $0x80] sm:$0xff]
        %v472 = vld [vmem:[%s366 + $0x88] sm:$0xff]
        %v473 = vld [vmem:[%s366 + $0x90] sm:$0xff]
        %v474 = vld [vmem:[%s366 + $0x98] sm:$0xff]
        %v475 = vld [vmem:[%s366 + $0xa0] sm:$0xff]
        %v476 = vld [vmem:[%s366 + $0xa8] sm:$0xff]
        %v477 = vld [vmem:[%s366 + $0xb0] sm:$0xff]
        %v478 = vld [vmem:[%s366 + $0xb8] sm:$0xff]
        %v479 = vld [vmem:[%s366 + $0xc0] sm:$0xff]
        %v480 = vld [vmem:[%s366 + $0xc8] sm:$0xff]
        %v481 = vld [vmem:[%s366 + $0xd0] sm:$0xff]
        %v482 = vld [vmem:[%s366 + $0xd8] sm:$0xff]
        %v483 = vld [vmem:[%s366 + $0xe0] sm:$0xff]
        %v484 = vld [vmem:[%s366 + $0xe8] sm:$0xff]
        %v485 = vld [vmem:[%s366 + $0xf0] sm:$0xff]
        %v486 = vld [vmem:[%s366 + $0xf8] sm:$0xff]
        %v487 = vld [vmem:[%s366 + $0x100] sm:$0xff]
        %v488 = vld [vmem:[%s366 + $0x108] sm:$0xff]
        %v489 = vld [vmem:[%s366 + $0x110] sm:$0xff]
        %v490 = vld [vmem:[%s366 + $0x118] sm:$0xff]
        %v491 = vld [vmem:[%s366 + $0x120] sm:$0xff]
        %v492 = vld [vmem:[%s366 + $0x128] sm:$0xff]
        %v493 = vld [vmem:[%s366 + $0x130] sm:$0xff]
        %v494 = vld [vmem:[%s366 + $0x138] sm:$0xff]
        %v495 = vld [vmem:[%s366 + $0x140] sm:$0xff]
        %v496 = vld [vmem:[%s366 + $0x148] sm:$0xff]
        %v497 = vld [vmem:[%s366 + $0x150] sm:$0xff]
        %v498 = vld [vmem:[%s366 + $0x158] sm:$0xff]
        %v499 = vld [vmem:[%s366 + $0x160] sm:$0xff]
        %v500 = vld [vmem:[%s366 + $0x168] sm:$0xff]
        %v501 = vld [vmem:[%s366 + $0x170] sm:$0xff]
        %v502 = vld [vmem:[%s366 + $0x178] sm:$0xff]
        %v503 = vld [vmem:[%s366 + $0x180] sm:$0xff]
        %v504 = vld [vmem:[%s366 + $0x188] sm:$0xff]
        %v505 = vld [vmem:[%s366 + $0x190] sm:$0xff]
        %v506 = vld [vmem:[%s366 + $0x198] sm:$0xff]
        %v507 = vld [vmem:[%s366 + $0x1a0] sm:$0xff]
        %v508 = vld [vmem:[%s366 + $0x1a8] sm:$0xff]
        %v509 = vld [vmem:[%s366 + $0x1b0] sm:$0xff]
        %v510 = vld [vmem:[%s366 + $0x1b8] sm:$0xff]
        %v511 = vld [vmem:[%s366 + $0x1c0] sm:$0xff]
        %v512 = vld [vmem:[%s366 + $0x1c8] sm:$0xff]
        %v513 = vld [vmem:[%s366 + $0x1d0] sm:$0xff]
        %v514 = vld [vmem:[%s366 + $0x1d8] sm:$0xff]
        %v515 = vld [vmem:[%s366 + $0x1e0] sm:$0xff]
        %v516 = vld [vmem:[%s366 + $0x1e8] sm:$0xff]
        %v517 = vld [vmem:[%s366 + $0x1f0] sm:$0xff]
        %v518 = vld [vmem:[%s366 + $0x1f8] sm:$0xff]
        %v519 = vld [vmem:[%s375] sm:$0xff]
        %v520 = vld [vmem:[%s375 + $0x8] sm:$0xff]
        %v521 = vld [vmem:[%s375 + $0x10] sm:$0xff]
        %v522 = vld [vmem:[%s375 + $0x18] sm:$0xff]
        %v523 = vstv %s451
        %v524 = vmul.f32 %v519, %v523
        %v525 = vmul.f32 %v520, %v523
        %v526 = vmul.f32 %v521, %v523
        %v527 = vmul.f32 %v522, %v523
        %v528 = vld [vmem:[%s384] sm:$0xff]
        %v529 = vld [vmem:[%s384 + $0x8] sm:$0xff]
        %v530 = vld [vmem:[%s384 + $0x10] sm:$0xff]
        %v531 = vld [vmem:[%s384 + $0x18] sm:$0xff]
        %v532 = vstv %s454
        %v533 = vmul.f32 %v528, %v532
        %v534 = vmul.f32 %v529, %v532
        %v535 = vmul.f32 %v530, %v532
        %v536 = vmul.f32 %v531, %v532
        %v537 = vlaneseq
        %v538 = vshrl.u32 %v537, 7
        %v539 = vadd.s32 %v538, 8
        %vm540 = vcmp.gt.s32.totalorder %v538, 0
        %vm541 = vcmp.gt.s32.totalorder %v539, 0
        %v542 = vsel %vm540, 1, 0
        %v543 = vsel %vm541, 1, 0
        %v544 = vcvt.s32.f32 %v542
        %v545 = vcvt.s32.f32 %v543
        %vm546 = vcmp.lt.s32.totalorder %v538, 15
        %vm547 = vcmp.lt.s32.totalorder %v539, 15
        %v548 = vsel %vm546, 1, 0
        %v549 = vsel %vm547, 1, 0
        %v550 = vcvt.s32.f32 %v548
        %v551 = vcvt.s32.f32 %v549
        %v552 = vrot.slane %v524, 7
        %v553 = vrot.slane %v525, 7
        %v554 = vrot.slane %v455, 7
        %v555 = vrot.slane %v456, 7
        %v556 = vrot.slane %v459, 7
        %v557 = vrot.slane %v460, 7
        %v558 = vrot.slane %v463, 7
        %v559 = vrot.slane %v464, 7
        %v560 = vrot.slane %v467, 7
        %v561 = vrot.slane %v468, 7
        %v562 = vrot.slane %v471, 7
        %v563 = vrot.slane %v472, 7
        %v564 = vrot.slane %v475, 7
        %v565 = vrot.slane %v476, 7
        %v566 = vrot.slane %v479, 7
        %v567 = vrot.slane %v480, 7
        %v568 = vrot.slane %v483, 7
        %v569 = vrot.slane %v484, 7
        %v570 = vrot.slane %v487, 7
        %v571 = vrot.slane %v488, 7
        %v572 = vrot.slane %v491, 7
        %v573 = vrot.slane %v492, 7
        %v574 = vrot.slane %v495, 7
        %v575 = vrot.slane %v496, 7
        %v576 = vrot.slane %v499, 7
        %v577 = vrot.slane %v500, 7
        %v578 = vrot.slane %v503, 7
        %v579 = vrot.slane %v504, 7
        %v580 = vrot.slane %v507, 7
        %v581 = vrot.slane %v508, 7
        %v582 = vrot.slane %v511, 7
        %v583 = vrot.slane %v512, 7
        %v584 = vrot.slane %v515, 7
        %v585 = vrot.slane %v516, 7
        %v586 = vrot.slane %v533, 7
        %v587 = vrot.slane %v534, 7
        %v588 = vrot.slane %v526, 7
        %v589 = vrot.slane %v527, 7
        %v590 = vrot.slane %v457, 7
        %v591 = vrot.slane %v458, 7
        %v592 = vrot.slane %v461, 7
        %v593 = vrot.slane %v462, 7
        %v594 = vrot.slane %v465, 7
        %v595 = vrot.slane %v466, 7
        %v596 = vrot.slane %v469, 7
        %v597 = vrot.slane %v470, 7
        %v598 = vrot.slane %v473, 7
        %v599 = vrot.slane %v474, 7
        %v600 = vrot.slane %v477, 7
        %v601 = vrot.slane %v478, 7
        %v602 = vrot.slane %v481, 7
        %v603 = vrot.slane %v482, 7
        %v604 = vrot.slane %v485, 7
        %v605 = vrot.slane %v486, 7
        %v606 = vrot.slane %v489, 7
        %v607 = vrot.slane %v490, 7
        %v608 = vrot.slane %v493, 7
        %v609 = vrot.slane %v494, 7
        %v610 = vrot.slane %v497, 7
        %v611 = vrot.slane %v498, 7
        %v612 = vrot.slane %v501, 7
        %v613 = vrot.slane %v502, 7
        %v614 = vrot.slane %v505, 7
        %v615 = vrot.slane %v506, 7
        %v616 = vrot.slane %v509, 7
        %v617 = vrot.slane %v510, 7
        %v618 = vrot.slane %v513, 7
        %v619 = vrot.slane %v514, 7
        %v620 = vrot.slane %v517, 7
        %v621 = vrot.slane %v518, 7
        %v622 = vrot.slane %v535, 7
        %v623 = vrot.slane %v536, 7
        %vm624 = vcmp.lt.s32.totalorder %v538, 1
        %v625 = vsel %vm624, %v552, %v588
        %v626 = vsel %vm624, %v553, %v589
        %v627 = vsel %vm624, %v554, %v590
        %v628 = vsel %vm624, %v555, %v591
        %v629 = vsel %vm624, %v556, %v592
        %v630 = vsel %vm624, %v557, %v593
        %v631 = vsel %vm624, %v558, %v594
        %v632 = vsel %vm624, %v559, %v595
        %v633 = vsel %vm624, %v560, %v596
        %v634 = vsel %vm624, %v561, %v597
        %v635 = vsel %vm624, %v562, %v598
        %v636 = vsel %vm624, %v563, %v599
        %v637 = vsel %vm624, %v564, %v600
        %v638 = vsel %vm624, %v565, %v601
        %v639 = vsel %vm624, %v566, %v602
        %v640 = vsel %vm624, %v567, %v603
        %v641 = vsel %vm624, %v568, %v604
        %v642 = vsel %vm624, %v569, %v605
        %v643 = vsel %vm624, %v570, %v606
        %v644 = vsel %vm624, %v571, %v607
        %v645 = vsel %vm624, %v572, %v608
        %v646 = vsel %vm624, %v573, %v609
        %v647 = vsel %vm624, %v574, %v610
        %v648 = vsel %vm624, %v575, %v611
        %v649 = vsel %vm624, %v576, %v612
        %v650 = vsel %vm624, %v577, %v613
        %v651 = vsel %vm624, %v578, %v614
        %v652 = vsel %vm624, %v579, %v615
        %v653 = vsel %vm624, %v580, %v616
        %v654 = vsel %vm624, %v581, %v617
        %v655 = vsel %vm624, %v582, %v618
        %v656 = vsel %vm624, %v583, %v619
        %v657 = vsel %vm624, %v584, %v620
        %v658 = vsel %vm624, %v585, %v621
        %v659 = vsel %vm624, %v586, %v622
        %v660 = vsel %vm624, %v587, %v623
        %v661 = vsel %vm624, %v588, %v552
        %v662 = vsel %vm624, %v589, %v553
        %v663 = vsel %vm624, %v590, %v554
        %v664 = vsel %vm624, %v591, %v555
        %v665 = vsel %vm624, %v592, %v556
        %v666 = vsel %vm624, %v593, %v557
        %v667 = vsel %vm624, %v594, %v558
        %v668 = vsel %vm624, %v595, %v559
        %v669 = vsel %vm624, %v596, %v560
        %v670 = vsel %vm624, %v597, %v561
        %v671 = vsel %vm624, %v598, %v562
        %v672 = vsel %vm624, %v599, %v563
        %v673 = vsel %vm624, %v600, %v564
        %v674 = vsel %vm624, %v601, %v565
        %v675 = vsel %vm624, %v602, %v566
        %v676 = vsel %vm624, %v603, %v567
        %v677 = vsel %vm624, %v604, %v568
        %v678 = vsel %vm624, %v605, %v569
        %v679 = vsel %vm624, %v606, %v570
        %v680 = vsel %vm624, %v607, %v571
        %v681 = vsel %vm624, %v608, %v572
        %v682 = vsel %vm624, %v609, %v573
        %v683 = vsel %vm624, %v610, %v574
        %v684 = vsel %vm624, %v611, %v575
        %v685 = vsel %vm624, %v612, %v576
        %v686 = vsel %vm624, %v613, %v577
        %v687 = vsel %vm624, %v614, %v578
        %v688 = vsel %vm624, %v615, %v579
        %v689 = vsel %vm624, %v616, %v580
        %v690 = vsel %vm624, %v617, %v581
        %v691 = vsel %vm624, %v618, %v582
        %v692 = vsel %vm624, %v619, %v583
        %v693 = vsel %vm624, %v620, %v584
        %v694 = vsel %vm624, %v621, %v585
        %v695 = vsel %vm624, %v622, %v586
        %v696 = vsel %vm624, %v623, %v587
        %v697 = vmul.f32 %v661, %v544
        %v698 = vmul.f32 %v662, %v544
        %v699 = vmul.f32 %v625, %v545
        %v700 = vmul.f32 %v626, %v545
        %v701 = vmul.f32 %v663, %v544
        %v702 = vmul.f32 %v664, %v544
        %v703 = vmul.f32 %v627, %v545
        %v704 = vmul.f32 %v628, %v545
        %v705 = vmul.f32 %v665, %v544
        %v706 = vmul.f32 %v666, %v544
        %v707 = vmul.f32 %v629, %v545
        %v708 = vmul.f32 %v630, %v545
        %v709 = vmul.f32 %v667, %v544
        %v710 = vmul.f32 %v668, %v544
        %v711 = vmul.f32 %v631, %v545
        %v712 = vmul.f32 %v632, %v545
        %v713 = vmul.f32 %v669, %v544
        %v714 = vmul.f32 %v670, %v544
        %v715 = vmul.f32 %v633, %v545
        %v716 = vmul.f32 %v634, %v545
        %v717 = vmul.f32 %v671, %v544
        %v718 = vmul.f32 %v672, %v544
        %v719 = vmul.f32 %v635, %v545
        %v720 = vmul.f32 %v636, %v545
        %v721 = vmul.f32 %v673, %v544
        %v722 = vmul.f32 %v674, %v544
        %v723 = vmul.f32 %v637, %v545
        %v724 = vmul.f32 %v638, %v545
        %v725 = vmul.f32 %v675, %v544
        %v726 = vmul.f32 %v676, %v544
        %v727 = vmul.f32 %v639, %v545
        %v728 = vmul.f32 %v640, %v545
        %v729 = vmul.f32 %v677, %v544
        %v730 = vmul.f32 %v678, %v544
        %v731 = vmul.f32 %v641, %v545
        %v732 = vmul.f32 %v642, %v545
        %v733 = vmul.f32 %v679, %v544
        %v734 = vmul.f32 %v680, %v544
        %v735 = vmul.f32 %v643, %v545
        %v736 = vmul.f32 %v644, %v545
        %v737 = vmul.f32 %v681, %v544
        %v738 = vmul.f32 %v682, %v544
        %v739 = vmul.f32 %v645, %v545
        %v740 = vmul.f32 %v646, %v545
        %v741 = vmul.f32 %v683, %v544
        %v742 = vmul.f32 %v684, %v544
        %v743 = vmul.f32 %v647, %v545
        %v744 = vmul.f32 %v648, %v545
        %v745 = vmul.f32 %v685, %v544
        %v746 = vmul.f32 %v686, %v544
        %v747 = vmul.f32 %v649, %v545
        %v748 = vmul.f32 %v650, %v545
        %v749 = vmul.f32 %v687, %v544
        %v750 = vmul.f32 %v688, %v544
        %v751 = vmul.f32 %v651, %v545
        %v752 = vmul.f32 %v652, %v545
        %v753 = vmul.f32 %v689, %v544
        %v754 = vmul.f32 %v690, %v544
        %v755 = vmul.f32 %v653, %v545
        %v756 = vmul.f32 %v654, %v545
        %v757 = vmul.f32 %v691, %v544
        %v758 = vmul.f32 %v692, %v544
        %v759 = vmul.f32 %v655, %v545
        %v760 = vmul.f32 %v656, %v545
        %v761 = vmul.f32 %v693, %v544
        %v762 = vmul.f32 %v694, %v544
        %v763 = vmul.f32 %v657, %v545
        %v764 = vmul.f32 %v658, %v545
        %v765 = vmul.f32 %v695, %v544
        %v766 = vmul.f32 %v696, %v544
        %v767 = vmul.f32 %v659, %v545
        %v768 = vmul.f32 %v660, %v545
        %v769 = vrot.slane %v524, 1
        %v770 = vrot.slane %v525, 1
        %v771 = vrot.slane %v455, 1
        %v772 = vrot.slane %v456, 1
        %v773 = vrot.slane %v459, 1
        %v774 = vrot.slane %v460, 1
        %v775 = vrot.slane %v463, 1
        %v776 = vrot.slane %v464, 1
        %v777 = vrot.slane %v467, 1
        %v778 = vrot.slane %v468, 1
        %v779 = vrot.slane %v471, 1
        %v780 = vrot.slane %v472, 1
        %v781 = vrot.slane %v475, 1
        %v782 = vrot.slane %v476, 1
        %v783 = vrot.slane %v479, 1
        %v784 = vrot.slane %v480, 1
        %v785 = vrot.slane %v483, 1
        %v786 = vrot.slane %v484, 1
        %v787 = vrot.slane %v487, 1
        %v788 = vrot.slane %v488, 1
        %v789 = vrot.slane %v491, 1
        %v790 = vrot.slane %v492, 1
        %v791 = vrot.slane %v495, 1
        %v792 = vrot.slane %v496, 1
        %v793 = vrot.slane %v499, 1
        %v794 = vrot.slane %v500, 1
        %v795 = vrot.slane %v503, 1
        %v796 = vrot.slane %v504, 1
        %v797 = vrot.slane %v507, 1
        %v798 = vrot.slane %v508, 1
        %v799 = vrot.slane %v511, 1
        %v800 = vrot.slane %v512, 1
        %v801 = vrot.slane %v515, 1
        %v802 = vrot.slane %v516, 1
        %v803 = vrot.slane %v533, 1
        %v804 = vrot.slane %v534, 1
        %v805 = vrot.slane %v526, 1
        %v806 = vrot.slane %v527, 1
        %v807 = vrot.slane %v457, 1
        %v808 = vrot.slane %v458, 1
        %v809 = vrot.slane %v461, 1
        %v810 = vrot.slane %v462, 1
        %v811 = vrot.slane %v465, 1
        %v812 = vrot.slane %v466, 1
        %v813 = vrot.slane %v469, 1
        %v814 = vrot.slane %v470, 1
        %v815 = vrot.slane %v473, 1
        %v816 = vrot.slane %v474, 1
        %v817 = vrot.slane %v477, 1
        %v818 = vrot.slane %v478, 1
        %v819 = vrot.slane %v481, 1
        %v820 = vrot.slane %v482, 1
        %v821 = vrot.slane %v485, 1
        %v822 = vrot.slane %v486, 1
        %v823 = vrot.slane %v489, 1
        %v824 = vrot.slane %v490, 1
        %v825 = vrot.slane %v493, 1
        %v826 = vrot.slane %v494, 1
        %v827 = vrot.slane %v497, 1
        %v828 = vrot.slane %v498, 1
        %v829 = vrot.slane %v501, 1
        %v830 = vrot.slane %v502, 1
        %v831 = vrot.slane %v505, 1
        %v832 = vrot.slane %v506, 1
        %v833 = vrot.slane %v509, 1
        %v834 = vrot.slane %v510, 1
        %v835 = vrot.slane %v513, 1
        %v836 = vrot.slane %v514, 1
        %v837 = vrot.slane %v517, 1
        %v838 = vrot.slane %v518, 1
        %v839 = vrot.slane %v535, 1
        %v840 = vrot.slane %v536, 1
        %vm841 = vcmp.lt.s32.totalorder %v538, 7
        %v842 = vsel %vm841, %v769, %v805
        %v843 = vsel %vm841, %v770, %v806
        %v844 = vsel %vm841, %v771, %v807
        %v845 = vsel %vm841, %v772, %v808
        %v846 = vsel %vm841, %v773, %v809
        %v847 = vsel %vm841, %v774, %v810
        %v848 = vsel %vm841, %v775, %v811
        %v849 = vsel %vm841, %v776, %v812
        %v850 = vsel %vm841, %v777, %v813
        %v851 = vsel %vm841, %v778, %v814
        %v852 = vsel %vm841, %v779, %v815
        %v853 = vsel %vm841, %v780, %v816
        %v854 = vsel %vm841, %v781, %v817
        %v855 = vsel %vm841, %v782, %v818
        %v856 = vsel %vm841, %v783, %v819
        %v857 = vsel %vm841, %v784, %v820
        %v858 = vsel %vm841, %v785, %v821
        %v859 = vsel %vm841, %v786, %v822
        %v860 = vsel %vm841, %v787, %v823
        %v861 = vsel %vm841, %v788, %v824
        %v862 = vsel %vm841, %v789, %v825
        %v863 = vsel %vm841, %v790, %v826
        %v864 = vsel %vm841, %v791, %v827
        %v865 = vsel %vm841, %v792, %v828
        %v866 = vsel %vm841, %v793, %v829
        %v867 = vsel %vm841, %v794, %v830
        %v868 = vsel %vm841, %v795, %v831
        %v869 = vsel %vm841, %v796, %v832
        %v870 = vsel %vm841, %v797, %v833
        %v871 = vsel %vm841, %v798, %v834
        %v872 = vsel %vm841, %v799, %v835
        %v873 = vsel %vm841, %v800, %v836
        %v874 = vsel %vm841, %v801, %v837
        %v875 = vsel %vm841, %v802, %v838
        %v876 = vsel %vm841, %v803, %v839
        %v877 = vsel %vm841, %v804, %v840
        %v878 = vsel %vm841, %v805, %v769
        %v879 = vsel %vm841, %v806, %v770
        %v880 = vsel %vm841, %v807, %v771
        %v881 = vsel %vm841, %v808, %v772
        %v882 = vsel %vm841, %v809, %v773
        %v883 = vsel %vm841, %v810, %v774
        %v884 = vsel %vm841, %v811, %v775
        %v885 = vsel %vm841, %v812, %v776
        %v886 = vsel %vm841, %v813, %v777
        %v887 = vsel %vm841, %v814, %v778
        %v888 = vsel %vm841, %v815, %v779
        %v889 = vsel %vm841, %v816, %v780
        %v890 = vsel %vm841, %v817, %v781
        %v891 = vsel %vm841, %v818, %v782
        %v892 = vsel %vm841, %v819, %v783
        %v893 = vsel %vm841, %v820, %v784
        %v894 = vsel %vm841, %v821, %v785
        %v895 = vsel %vm841, %v822, %v786
        %v896 = vsel %vm841, %v823, %v787
        %v897 = vsel %vm841, %v824, %v788
        %v898 = vsel %vm841, %v825, %v789
        %v899 = vsel %vm841, %v826, %v790
        %v900 = vsel %vm841, %v827, %v791
        %v901 = vsel %vm841, %v828, %v792
        %v902 = vsel %vm841, %v829, %v793
        %v903 = vsel %vm841, %v830, %v794
        %v904 = vsel %vm841, %v831, %v795
        %v905 = vsel %vm841, %v832, %v796
        %v906 = vsel %vm841, %v833, %v797
        %v907 = vsel %vm841, %v834, %v798
        %v908 = vsel %vm841, %v835, %v799
        %v909 = vsel %vm841, %v836, %v800
        %v910 = vsel %vm841, %v837, %v801
        %v911 = vsel %vm841, %v838, %v802
        %v912 = vsel %vm841, %v839, %v803
        %v913 = vsel %vm841, %v840, %v804
        %v914 = vmul.f32 %v842, %v550
        %v915 = vmul.f32 %v843, %v550
        %v916 = vmul.f32 %v878, %v551
        %v917 = vmul.f32 %v879, %v551
        %v918 = vmul.f32 %v844, %v550
        %v919 = vmul.f32 %v845, %v550
        %v920 = vmul.f32 %v880, %v551
        %v921 = vmul.f32 %v881, %v551
        %v922 = vmul.f32 %v846, %v550
        %v923 = vmul.f32 %v847, %v550
        %v924 = vmul.f32 %v882, %v551
        %v925 = vmul.f32 %v883, %v551
        %v926 = vmul.f32 %v848, %v550
        %v927 = vmul.f32 %v849, %v550
        %v928 = vmul.f32 %v884, %v551
        %v929 = vmul.f32 %v885, %v551
        %v930 = vmul.f32 %v850, %v550
        %v931 = vmul.f32 %v851, %v550
        %v932 = vmul.f32 %v886, %v551
        %v933 = vmul.f32 %v887, %v551
        %v934 = vmul.f32 %v852, %v550
        %v935 = vmul.f32 %v853, %v550
        %v936 = vmul.f32 %v888, %v551
        %v937 = vmul.f32 %v889, %v551
        %v938 = vmul.f32 %v854, %v550
        %v939 = vmul.f32 %v855, %v550
        %v940 = vmul.f32 %v890, %v551
        %v941 = vmul.f32 %v891, %v551
        %v942 = vmul.f32 %v856, %v550
        %v943 = vmul.f32 %v857, %v550
        %v944 = vmul.f32 %v892, %v551
        %v945 = vmul.f32 %v893, %v551
        %v946 = vmul.f32 %v858, %v550
        %v947 = vmul.f32 %v859, %v550
        %v948 = vmul.f32 %v894, %v551
        %v949 = vmul.f32 %v895, %v551
        %v950 = vmul.f32 %v860, %v550
        %v951 = vmul.f32 %v861, %v550
        %v952 = vmul.f32 %v896, %v551
        %v953 = vmul.f32 %v897, %v551
        %v954 = vmul.f32 %v862, %v550
        %v955 = vmul.f32 %v863, %v550
        %v956 = vmul.f32 %v898, %v551
        %v957 = vmul.f32 %v899, %v551
        %v958 = vmul.f32 %v864, %v550
        %v959 = vmul.f32 %v865, %v550
        %v960 = vmul.f32 %v900, %v551
        %v961 = vmul.f32 %v901, %v551
        %v962 = vmul.f32 %v866, %v550
        %v963 = vmul.f32 %v867, %v550
        %v964 = vmul.f32 %v902, %v551
        %v965 = vmul.f32 %v903, %v551
        %v966 = vmul.f32 %v868, %v550
        %v967 = vmul.f32 %v869, %v550
        %v968 = vmul.f32 %v904, %v551
        %v969 = vmul.f32 %v905, %v551
        %v970 = vmul.f32 %v870, %v550
        %v971 = vmul.f32 %v871, %v550
        %v972 = vmul.f32 %v906, %v551
        %v973 = vmul.f32 %v907, %v551
        %v974 = vmul.f32 %v872, %v550
        %v975 = vmul.f32 %v873, %v550
        %v976 = vmul.f32 %v908, %v551
        %v977 = vmul.f32 %v909, %v551
        %v978 = vmul.f32 %v874, %v550
        %v979 = vmul.f32 %v875, %v550
        %v980 = vmul.f32 %v910, %v551
        %v981 = vmul.f32 %v911, %v551
        %v982 = vmul.f32 %v876, %v550
        %v983 = vmul.f32 %v877, %v550
        %v984 = vmul.f32 %v912, %v551
        %v985 = vmul.f32 %v913, %v551
        %v986 = vld [vmem:[#allocation8] sm:$0xff]
        %v987 = vld [vmem:[#allocation8 + $0x8] sm:$0xff]
        %v988 = vld [vmem:[#allocation8 + $0x10] sm:$0x1]
        %v989 = vld [vmem:[#allocation8 + $0x18] sm:$0x1]
        %v990 = vlaneseq
        %v991 = vshrl.u32 %v990, 7
        %v992 = vsub.s32 3, %v991
        %v993 = vrot.slane %v986, %v992
        %v994 = vlaneseq
        %v995 = vshrl.u32 %v994, 7
        %v996 = vsub.s32 3, %v995
        %v997 = vrot.slane %v987, %v996
        %v998 = vmul.f32 %v701, %v993
        %v999 = vmul.f32 %v702, %v997
        %v1000 = vmul.f32 %v703, %v993
        %v1001 = vmul.f32 %v704, %v997
        %v1002 = vmul.f32 %v705, %v993
        %v1003 = vmul.f32 %v706, %v997
        %v1004 = vmul.f32 %v707, %v993
        %v1005 = vmul.f32 %v708, %v997
        %v1006 = vmul.f32 %v709, %v993
        %v1007 = vmul.f32 %v710, %v997
        %v1008 = vmul.f32 %v711, %v993
        %v1009 = vmul.f32 %v712, %v997
        %v1010 = vmul.f32 %v713, %v993
        %v1011 = vmul.f32 %v714, %v997
        %v1012 = vmul.f32 %v715, %v993
        %v1013 = vmul.f32 %v716, %v997
        %v1014 = vmul.f32 %v717, %v993
        %v1015 = vmul.f32 %v718, %v997
        %v1016 = vmul.f32 %v719, %v993
        %v1017 = vmul.f32 %v720, %v997
        %v1018 = vmul.f32 %v721, %v993
        %v1019 = vmul.f32 %v722, %v997
        %v1020 = vmul.f32 %v723, %v993
        %v1021 = vmul.f32 %v724, %v997
        %v1022 = vmul.f32 %v725, %v993
        %v1023 = vmul.f32 %v726, %v997
        %v1024 = vmul.f32 %v727, %v993
        %v1025 = vmul.f32 %v728, %v997
        %v1026 = vmul.f32 %v729, %v993
        %v1027 = vmul.f32 %v730, %v997
        %v1028 = vmul.f32 %v731, %v993
        %v1029 = vmul.f32 %v732, %v997
        %v1030 = vmul.f32 %v733, %v993
        %v1031 = vmul.f32 %v734, %v997
        %v1032 = vmul.f32 %v735, %v993
        %v1033 = vmul.f32 %v736, %v997
        %v1034 = vmul.f32 %v737, %v993
        %v1035 = vmul.f32 %v738, %v997
        %v1036 = vmul.f32 %v739, %v993
        %v1037 = vmul.f32 %v740, %v997
        %v1038 = vmul.f32 %v741, %v993
        %v1039 = vmul.f32 %v742, %v997
        %v1040 = vmul.f32 %v743, %v993
        %v1041 = vmul.f32 %v744, %v997
        %v1042 = vmul.f32 %v745, %v993
        %v1043 = vmul.f32 %v746, %v997
        %v1044 = vmul.f32 %v747, %v993
        %v1045 = vmul.f32 %v748, %v997
        %v1046 = vmul.f32 %v749, %v993
        %v1047 = vmul.f32 %v750, %v997
        %v1048 = vmul.f32 %v751, %v993
        %v1049 = vmul.f32 %v752, %v997
        %v1050 = vmul.f32 %v753, %v993
        %v1051 = vmul.f32 %v754, %v997
        %v1052 = vmul.f32 %v755, %v993
        %v1053 = vmul.f32 %v756, %v997
        %v1054 = vmul.f32 %v757, %v993
        %v1055 = vmul.f32 %v758, %v997
        %v1056 = vmul.f32 %v759, %v993
        %v1057 = vmul.f32 %v760, %v997
        %v1058 = vmul.f32 %v761, %v993
        %v1059 = vmul.f32 %v762, %v997
        %v1060 = vmul.f32 %v763, %v993
        %v1061 = vmul.f32 %v764, %v997
        %v1062 = vlaneseq
        %v1063 = vshrl.u32 %v1062, 7
        %v1064 = vsub.s32 4, %v1063
        %v1065 = vrot.slane %v986, %v1064
        %v1066 = vlaneseq
        %v1067 = vshrl.u32 %v1066, 7
        %v1068 = vsub.s32 4, %v1067
        %v1069 = vrot.slane %v987, %v1068
        %v1070 = vmul.f32 %v455, %v1065
        %v1071 = vmul.f32 %v456, %v1069
        %v1072 = vmul.f32 %v457, %v1065
        %v1073 = vmul.f32 %v458, %v1069
        %v1074 = vmul.f32 %v459, %v1065
        %v1075 = vmul.f32 %v460, %v1069
        %v1076 = vmul.f32 %v461, %v1065
        %v1077 = vmul.f32 %v462, %v1069
        %v1078 = vmul.f32 %v463, %v1065
        %v1079 = vmul.f32 %v464, %v1069
        %v1080 = vmul.f32 %v465, %v1065
        %v1081 = vmul.f32 %v466, %v1069
        %v1082 = vmul.f32 %v467, %v1065
        %v1083 = vmul.f32 %v468, %v1069
        %v1084 = vmul.f32 %v469, %v1065
        %v1085 = vmul.f32 %v470, %v1069
        %v1086 = vmul.f32 %v471, %v1065
        %v1087 = vmul.f32 %v472, %v1069
        %v1088 = vmul.f32 %v473, %v1065
        %v1089 = vmul.f32 %v474, %v1069
        %v1090 = vmul.f32 %v475, %v1065
        %v1091 = vmul.f32 %v476, %v1069
        %v1092 = vmul.f32 %v477, %v1065
        %v1093 = vmul.f32 %v478, %v1069
        %v1094 = vmul.f32 %v479, %v1065
        %v1095 = vmul.f32 %v480, %v1069
        %v1096 = vmul.f32 %v481, %v1065
        %v1097 = vmul.f32 %v482, %v1069
        %v1098 = vmul.f32 %v483, %v1065
        %v1099 = vmul.f32 %v484, %v1069
        %v1100 = vmul.f32 %v485, %v1065
        %v1101 = vmul.f32 %v486, %v1069
        %v1102 = vmul.f32 %v487, %v1065
        %v1103 = vmul.f32 %v488, %v1069
        %v1104 = vmul.f32 %v489, %v1065
        %v1105 = vmul.f32 %v490, %v1069
        %v1106 = vmul.f32 %v491, %v1065
        %v1107 = vmul.f32 %v492, %v1069
        %v1108 = vmul.f32 %v493, %v1065
        %v1109 = vmul.f32 %v494, %v1069
        %v1110 = vmul.f32 %v495, %v1065
        %v1111 = vmul.f32 %v496, %v1069
        %v1112 = vmul.f32 %v497, %v1065
        %v1113 = vmul.f32 %v498, %v1069
        %v1114 = vmul.f32 %v499, %v1065
        %v1115 = vmul.f32 %v500, %v1069
        %v1116 = vmul.f32 %v501, %v1065
        %v1117 = vmul.f32 %v502, %v1069
        %v1118 = vmul.f32 %v503, %v1065
        %v1119 = vmul.f32 %v504, %v1069
        %v1120 = vmul.f32 %v505, %v1065
        %v1121 = vmul.f32 %v506, %v1069
        %v1122 = vmul.f32 %v507, %v1065
        %v1123 = vmul.f32 %v508, %v1069
        %v1124 = vmul.f32 %v509, %v1065
        %v1125 = vmul.f32 %v510, %v1069
        %v1126 = vmul.f32 %v511, %v1065
        %v1127 = vmul.f32 %v512, %v1069
        %v1128 = vmul.f32 %v513, %v1065
        %v1129 = vmul.f32 %v514, %v1069
        %v1130 = vmul.f32 %v515, %v1065
        %v1131 = vmul.f32 %v516, %v1069
        %v1132 = vmul.f32 %v517, %v1065
        %v1133 = vmul.f32 %v518, %v1069
        %v1134 = vadd.f32 %v998, %v1070
        %v1135 = vadd.f32 %v999, %v1071
        %v1136 = vadd.f32 %v1000, %v1072
        %v1137 = vadd.f32 %v1001, %v1073
        %v1138 = vadd.f32 %v1002, %v1074
        %v1139 = vadd.f32 %v1003, %v1075
        %v1140 = vadd.f32 %v1004, %v1076
        %v1141 = vadd.f32 %v1005, %v1077
        %v1142 = vadd.f32 %v1006, %v1078
        %v1143 = vadd.f32 %v1007, %v1079
        %v1144 = vadd.f32 %v1008, %v1080
        %v1145 = vadd.f32 %v1009, %v1081
        %v1146 = vadd.f32 %v1010, %v1082
        %v1147 = vadd.f32 %v1011, %v1083
        %v1148 = vadd.f32 %v1012, %v1084
        %v1149 = vadd.f32 %v1013, %v1085
        %v1150 = vadd.f32 %v1014, %v1086
        %v1151 = vadd.f32 %v1015, %v1087
        %v1152 = vadd.f32 %v1016, %v1088
        %v1153 = vadd.f32 %v1017, %v1089
        %v1154 = vadd.f32 %v1018, %v1090
        %v1155 = vadd.f32 %v1019, %v1091
        %v1156 = vadd.f32 %v1020, %v1092
        %v1157 = vadd.f32 %v1021, %v1093
        %v1158 = vadd.f32 %v1022, %v1094
        %v1159 = vadd.f32 %v1023, %v1095
        %v1160 = vadd.f32 %v1024, %v1096
        %v1161 = vadd.f32 %v1025, %v1097
        %v1162 = vadd.f32 %v1026, %v1098
        %v1163 = vadd.f32 %v1027, %v1099
        %v1164 = vadd.f32 %v1028, %v1100
        %v1165 = vadd.f32 %v1029, %v1101
        %v1166 = vadd.f32 %v1030, %v1102
        %v1167 = vadd.f32 %v1031, %v1103
        %v1168 = vadd.f32 %v1032, %v1104
        %v1169 = vadd.f32 %v1033, %v1105
        %v1170 = vadd.f32 %v1034, %v1106
        %v1171 = vadd.f32 %v1035, %v1107
        %v1172 = vadd.f32 %v1036, %v1108
        %v1173 = vadd.f32 %v1037, %v1109
        %v1174 = vadd.f32 %v1038, %v1110
        %v1175 = vadd.f32 %v1039, %v1111
        %v1176 = vadd.f32 %v1040, %v1112
        %v1177 = vadd.f32 %v1041, %v1113
        %v1178 = vadd.f32 %v1042, %v1114
        %v1179 = vadd.f32 %v1043, %v1115
        %v1180 = vadd.f32 %v1044, %v1116
        %v1181 = vadd.f32 %v1045, %v1117
        %v1182 = vadd.f32 %v1046, %v1118
        %v1183 = vadd.f32 %v1047, %v1119
        %v1184 = vadd.f32 %v1048, %v1120
        %v1185 = vadd.f32 %v1049, %v1121
        %v1186 = vadd.f32 %v1050, %v1122
        %v1187 = vadd.f32 %v1051, %v1123
        %v1188 = vadd.f32 %v1052, %v1124
        %v1189 = vadd.f32 %v1053, %v1125
        %v1190 = vadd.f32 %v1054, %v1126
        %v1191 = vadd.f32 %v1055, %v1127
        %v1192 = vadd.f32 %v1056, %v1128
        %v1193 = vadd.f32 %v1057, %v1129
        %v1194 = vadd.f32 %v1058, %v1130
        %v1195 = vadd.f32 %v1059, %v1131
        %v1196 = vadd.f32 %v1060, %v1132
        %v1197 = vadd.f32 %v1061, %v1133
        %v1198 = vlaneseq
        %v1199 = vshrl.u32 %v1198, 7
        %v1200 = vsub.s32 5, %v1199
        %v1201 = vrot.slane %v986, %v1200
        %v1202 = vlaneseq
        %v1203 = vshrl.u32 %v1202, 7
        %v1204 = vsub.s32 5, %v1203
        %v1205 = vrot.slane %v987, %v1204
        %v1206 = vmul.f32 %v918, %v1201
        %v1207 = vmul.f32 %v919, %v1205
        %v1208 = vmul.f32 %v920, %v1201
        %v1209 = vmul.f32 %v921, %v1205
        %v1210 = vmul.f32 %v922, %v1201
        %v1211 = vmul.f32 %v923, %v1205
        %v1212 = vmul.f32 %v924, %v1201
        %v1213 = vmul.f32 %v925, %v1205
        %v1214 = vmul.f32 %v926, %v1201
        %v1215 = vmul.f32 %v927, %v1205
        %v1216 = vmul.f32 %v928, %v1201
        %v1217 = vmul.f32 %v929, %v1205
        %v1218 = vmul.f32 %v930, %v1201
        %v1219 = vmul.f32 %v931, %v1205
        %v1220 = vmul.f32 %v932, %v1201
        %v1221 = vmul.f32 %v933, %v1205
        %v1222 = vmul.f32 %v934, %v1201
        %v1223 = vmul.f32 %v935, %v1205
        %v1224 = vmul.f32 %v936, %v1201
        %v1225 = vmul.f32 %v937, %v1205
        %v1226 = vmul.f32 %v938, %v1201
        %v1227 = vmul.f32 %v939, %v1205
        %v1228 = vmul.f32 %v940, %v1201
        %v1229 = vmul.f32 %v941, %v1205
        %v1230 = vmul.f32 %v942, %v1201
        %v1231 = vmul.f32 %v943, %v1205
        %v1232 = vmul.f32 %v944, %v1201
        %v1233 = vmul.f32 %v945, %v1205
        %v1234 = vmul.f32 %v946, %v1201
        %v1235 = vmul.f32 %v947, %v1205
        %v1236 = vmul.f32 %v948, %v1201
        %v1237 = vmul.f32 %v949, %v1205
        %v1238 = vmul.f32 %v950, %v1201
        %v1239 = vmul.f32 %v951, %v1205
        %v1240 = vmul.f32 %v952, %v1201
        %v1241 = vmul.f32 %v953, %v1205
        %v1242 = vmul.f32 %v954, %v1201
        %v1243 = vmul.f32 %v955, %v1205
        %v1244 = vmul.f32 %v956, %v1201
        %v1245 = vmul.f32 %v957, %v1205
        %v1246 = vmul.f32 %v958, %v1201
        %v1247 = vmul.f32 %v959, %v1205
        %v1248 = vmul.f32 %v960, %v1201
        %v1249 = vmul.f32 %v961, %v1205
        %v1250 = vmul.f32 %v962, %v1201
        %v1251 = vmul.f32 %v963, %v1205
        %v1252 = vmul.f32 %v964, %v1201
        %v1253 = vmul.f32 %v965, %v1205
        %v1254 = vmul.f32 %v966, %v1201
        %v1255 = vmul.f32 %v967, %v1205
        %v1256 = vmul.f32 %v968, %v1201
        %v1257 = vmul.f32 %v969, %v1205
        %v1258 = vmul.f32 %v970, %v1201
        %v1259 = vmul.f32 %v971, %v1205
        %v1260 = vmul.f32 %v972, %v1201
        %v1261 = vmul.f32 %v973, %v1205
        %v1262 = vmul.f32 %v974, %v1201
        %v1263 = vmul.f32 %v975, %v1205
        %v1264 = vmul.f32 %v976, %v1201
        %v1265 = vmul.f32 %v977, %v1205
        %v1266 = vmul.f32 %v978, %v1201
        %v1267 = vmul.f32 %v979, %v1205
        %v1268 = vmul.f32 %v980, %v1201
        %v1269 = vmul.f32 %v981, %v1205
        %v1270 = vadd.f32 %v1134, %v1206
        %v1271 = vadd.f32 %v1135, %v1207
        %v1272 = vadd.f32 %v1136, %v1208
        %v1273 = vadd.f32 %v1137, %v1209
        %v1274 = vadd.f32 %v1138, %v1210
        %v1275 = vadd.f32 %v1139, %v1211
        %v1276 = vadd.f32 %v1140, %v1212
        %v1277 = vadd.f32 %v1141, %v1213
        %v1278 = vadd.f32 %v1142, %v1214
        %v1279 = vadd.f32 %v1143, %v1215
        %v1280 = vadd.f32 %v1144, %v1216
        %v1281 = vadd.f32 %v1145, %v1217
        %v1282 = vadd.f32 %v1146, %v1218
        %v1283 = vadd.f32 %v1147, %v1219
        %v1284 = vadd.f32 %v1148, %v1220
        %v1285 = vadd.f32 %v1149, %v1221
        %v1286 = vadd.f32 %v1150, %v1222
        %v1287 = vadd.f32 %v1151, %v1223
        %v1288 = vadd.f32 %v1152, %v1224
        %v1289 = vadd.f32 %v1153, %v1225
        %v1290 = vadd.f32 %v1154, %v1226
        %v1291 = vadd.f32 %v1155, %v1227
        %v1292 = vadd.f32 %v1156, %v1228
        %v1293 = vadd.f32 %v1157, %v1229
        %v1294 = vadd.f32 %v1158, %v1230
        %v1295 = vadd.f32 %v1159, %v1231
        %v1296 = vadd.f32 %v1160, %v1232
        %v1297 = vadd.f32 %v1161, %v1233
        %v1298 = vadd.f32 %v1162, %v1234
        %v1299 = vadd.f32 %v1163, %v1235
        %v1300 = vadd.f32 %v1164, %v1236
        %v1301 = vadd.f32 %v1165, %v1237
        %v1302 = vadd.f32 %v1166, %v1238
        %v1303 = vadd.f32 %v1167, %v1239
        %v1304 = vadd.f32 %v1168, %v1240
        %v1305 = vadd.f32 %v1169, %v1241
        %v1306 = vadd.f32 %v1170, %v1242
        %v1307 = vadd.f32 %v1171, %v1243
        %v1308 = vadd.f32 %v1172, %v1244
        %v1309 = vadd.f32 %v1173, %v1245
        %v1310 = vadd.f32 %v1174, %v1246
        %v1311 = vadd.f32 %v1175, %v1247
        %v1312 = vadd.f32 %v1176, %v1248
        %v1313 = vadd.f32 %v1177, %v1249
        %v1314 = vadd.f32 %v1178, %v1250
        %v1315 = vadd.f32 %v1179, %v1251
        %v1316 = vadd.f32 %v1180, %v1252
        %v1317 = vadd.f32 %v1181, %v1253
        %v1318 = vadd.f32 %v1182, %v1254
        %v1319 = vadd.f32 %v1183, %v1255
        %v1320 = vadd.f32 %v1184, %v1256
        %v1321 = vadd.f32 %v1185, %v1257
        %v1322 = vadd.f32 %v1186, %v1258
        %v1323 = vadd.f32 %v1187, %v1259
        %v1324 = vadd.f32 %v1188, %v1260
        %v1325 = vadd.f32 %v1189, %v1261
        %v1326 = vadd.f32 %v1190, %v1262
        %v1327 = vadd.f32 %v1191, %v1263
        %v1328 = vadd.f32 %v1192, %v1264
        %v1329 = vadd.f32 %v1193, %v1265
        %v1330 = vadd.f32 %v1194, %v1266
        %v1331 = vadd.f32 %v1195, %v1267
        %v1332 = vadd.f32 %v1196, %v1268
        %v1333 = vadd.f32 %v1197, %v1269
        %v1334 = vld [vmem:[%s445] sm:$0x3]
        %v1336 = vlaneseq
        %v1337 = vshrl.u32 %v1336, 7
        %v1338 = vsub.s32 0, %v1337
        %v1339 = vrot.slane %v1334, %v1338
        %v1340 = vlaneseq
        %v1341 = vshrl.u32 %v1340, 7
        %v1342 = vsub.s32 1, %v1341
        %v1343 = vrot.slane %v1334, %v1342
        %v1346 = vadd.f32 %v1270, %v1339
        %v1347 = vadd.f32 %v1271, %v1343
        %v1348 = vadd.f32 %v1272, %v1339
        %v1349 = vadd.f32 %v1273, %v1343
        %v1350 = vadd.f32 %v1274, %v1339
        %v1351 = vadd.f32 %v1275, %v1343
        %v1352 = vadd.f32 %v1276, %v1339
        %v1353 = vadd.f32 %v1277, %v1343
        %v1354 = vadd.f32 %v1278, %v1339
        %v1355 = vadd.f32 %v1279, %v1343
        %v1356 = vadd.f32 %v1280, %v1339
        %v1357 = vadd.f32 %v1281, %v1343
        %v1358 = vadd.f32 %v1282, %v1339
        %v1359 = vadd.f32 %v1283, %v1343
        %v1360 = vadd.f32 %v1284, %v1339
        %v1361 = vadd.f32 %v1285, %v1343
        %v1362 = vadd.f32 %v1286, %v1339
        %v1363 = vadd.f32 %v1287, %v1343
        %v1364 = vadd.f32 %v1288, %v1339
        %v1365 = vadd.f32 %v1289, %v1343
        %v1366 = vadd.f32 %v1290, %v1339
        %v1367 = vadd.f32 %v1291, %v1343
        %v1368 = vadd.f32 %v1292, %v1339
        %v1369 = vadd.f32 %v1293, %v1343
        %v1370 = vadd.f32 %v1294, %v1339
        %v1371 = vadd.f32 %v1295, %v1343
        %v1372 = vadd.f32 %v1296, %v1339
        %v1373 = vadd.f32 %v1297, %v1343
        %v1374 = vadd.f32 %v1298, %v1339
        %v1375 = vadd.f32 %v1299, %v1343
        %v1376 = vadd.f32 %v1300, %v1339
        %v1377 = vadd.f32 %v1301, %v1343
        %v1378 = vadd.f32 %v1302, %v1339
        %v1379 = vadd.f32 %v1303, %v1343
        %v1380 = vadd.f32 %v1304, %v1339
        %v1381 = vadd.f32 %v1305, %v1343
        %v1382 = vadd.f32 %v1306, %v1339
        %v1383 = vadd.f32 %v1307, %v1343
        %v1384 = vadd.f32 %v1308, %v1339
        %v1385 = vadd.f32 %v1309, %v1343
        %v1386 = vadd.f32 %v1310, %v1339
        %v1387 = vadd.f32 %v1311, %v1343
        %v1388 = vadd.f32 %v1312, %v1339
        %v1389 = vadd.f32 %v1313, %v1343
        %v1390 = vadd.f32 %v1314, %v1339
        %v1391 = vadd.f32 %v1315, %v1343
        %v1392 = vadd.f32 %v1316, %v1339
        %v1393 = vadd.f32 %v1317, %v1343
        %v1394 = vadd.f32 %v1318, %v1339
        %v1395 = vadd.f32 %v1319, %v1343
        %v1396 = vadd.f32 %v1320, %v1339
        %v1397 = vadd.f32 %v1321, %v1343
        %v1398 = vadd.f32 %v1322, %v1339
        %v1399 = vadd.f32 %v1323, %v1343
        %v1400 = vadd.f32 %v1324, %v1339
        %v1401 = vadd.f32 %v1325, %v1343
        %v1402 = vadd.f32 %v1326, %v1339
        %v1403 = vadd.f32 %v1327, %v1343
        %v1404 = vadd.f32 %v1328, %v1339
        %v1405 = vadd.f32 %v1329, %v1343
        %v1406 = vadd.f32 %v1330, %v1339
        %v1407 = vadd.f32 %v1331, %v1343
        %v1408 = vadd.f32 %v1332, %v1339
        %v1409 = vadd.f32 %v1333, %v1343
        %v1410 = vlaneseq
        %v1411 = vshrl.u32 %v1410, 7
        %v1412 = vsub.s32 0, %v1411
        %v1413 = vrot.slane %v986, %v1412
        %v1414 = vlaneseq
        %v1415 = vshrl.u32 %v1414, 7
        %v1416 = vsub.s32 0, %v1415
        %v1417 = vrot.slane %v987, %v1416
        %v1418 = vmul.f32 %v697, %v1413
        %v1419 = vmul.f32 %v698, %v1417
        %v1420 = vmul.f32 %v699, %v1413
        %v1421 = vmul.f32 %v700, %v1417
        %v1422 = vmul.f32 %v701, %v1413
        %v1423 = vmul.f32 %v702, %v1417
        %v1424 = vmul.f32 %v703, %v1413
        %v1425 = vmul.f32 %v704, %v1417
        %v1426 = vmul.f32 %v705, %v1413
        %v1427 = vmul.f32 %v706, %v1417
        %v1428 = vmul.f32 %v707, %v1413
        %v1429 = vmul.f32 %v708, %v1417
        %v1430 = vmul.f32 %v709, %v1413
        %v1431 = vmul.f32 %v710, %v1417
        %v1432 = vmul.f32 %v711, %v1413
        %v1433 = vmul.f32 %v712, %v1417
        %v1434 = vmul.f32 %v713, %v1413
        %v1435 = vmul.f32 %v714, %v1417
        %v1436 = vmul.f32 %v715, %v1413
        %v1437 = vmul.f32 %v716, %v1417
        %v1438 = vmul.f32 %v717, %v1413
        %v1439 = vmul.f32 %v718, %v1417
        %v1440 = vmul.f32 %v719, %v1413
        %v1441 = vmul.f32 %v720, %v1417
        %v1442 = vmul.f32 %v721, %v1413
        %v1443 = vmul.f32 %v722, %v1417
        %v1444 = vmul.f32 %v723, %v1413
        %v1445 = vmul.f32 %v724, %v1417
        %v1446 = vmul.f32 %v725, %v1413
        %v1447 = vmul.f32 %v726, %v1417
        %v1448 = vmul.f32 %v727, %v1413
        %v1449 = vmul.f32 %v728, %v1417
        %v1450 = vmul.f32 %v729, %v1413
        %v1451 = vmul.f32 %v730, %v1417
        %v1452 = vmul.f32 %v731, %v1413
        %v1453 = vmul.f32 %v732, %v1417
        %v1454 = vmul.f32 %v733, %v1413
        %v1455 = vmul.f32 %v734, %v1417
        %v1456 = vmul.f32 %v735, %v1413
        %v1457 = vmul.f32 %v736, %v1417
        %v1458 = vmul.f32 %v737, %v1413
        %v1459 = vmul.f32 %v738, %v1417
        %v1460 = vmul.f32 %v739, %v1413
        %v1461 = vmul.f32 %v740, %v1417
        %v1462 = vmul.f32 %v741, %v1413
        %v1463 = vmul.f32 %v742, %v1417
        %v1464 = vmul.f32 %v743, %v1413
        %v1465 = vmul.f32 %v744, %v1417
        %v1466 = vmul.f32 %v745, %v1413
        %v1467 = vmul.f32 %v746, %v1417
        %v1468 = vmul.f32 %v747, %v1413
        %v1469 = vmul.f32 %v748, %v1417
        %v1470 = vmul.f32 %v749, %v1413
        %v1471 = vmul.f32 %v750, %v1417
        %v1472 = vmul.f32 %v751, %v1413
        %v1473 = vmul.f32 %v752, %v1417
        %v1474 = vmul.f32 %v753, %v1413
        %v1475 = vmul.f32 %v754, %v1417
        %v1476 = vmul.f32 %v755, %v1413
        %v1477 = vmul.f32 %v756, %v1417
        %v1478 = vmul.f32 %v757, %v1413
        %v1479 = vmul.f32 %v758, %v1417
        %v1480 = vmul.f32 %v759, %v1413
        %v1481 = vmul.f32 %v760, %v1417
        %v1482 = vlaneseq
        %v1483 = vshrl.u32 %v1482, 7
        %v1484 = vsub.s32 1, %v1483
        %v1485 = vrot.slane %v986, %v1484
        %v1486 = vlaneseq
        %v1487 = vshrl.u32 %v1486, 7
        %v1488 = vsub.s32 1, %v1487
        %v1489 = vrot.slane %v987, %v1488
        %v1490 = vmul.f32 %v524, %v1485
        %v1491 = vmul.f32 %v525, %v1489
        %v1492 = vmul.f32 %v526, %v1485
        %v1493 = vmul.f32 %v527, %v1489
        %v1494 = vmul.f32 %v455, %v1485
        %v1495 = vmul.f32 %v456, %v1489
        %v1496 = vmul.f32 %v457, %v1485
        %v1497 = vmul.f32 %v458, %v1489
        %v1498 = vmul.f32 %v459, %v1485
        %v1499 = vmul.f32 %v460, %v1489
        %v1500 = vmul.f32 %v461, %v1485
        %v1501 = vmul.f32 %v462, %v1489
        %v1502 = vmul.f32 %v463, %v1485
        %v1503 = vmul.f32 %v464, %v1489
        %v1504 = vmul.f32 %v465, %v1485
        %v1505 = vmul.f32 %v466, %v1489
        %v1506 = vmul.f32 %v467, %v1485
        %v1507 = vmul.f32 %v468, %v1489
        %v1508 = vmul.f32 %v469, %v1485
        %v1509 = vmul.f32 %v470, %v1489
        %v1510 = vmul.f32 %v471, %v1485
        %v1511 = vmul.f32 %v472, %v1489
        %v1512 = vmul.f32 %v473, %v1485
        %v1513 = vmul.f32 %v474, %v1489
        %v1514 = vmul.f32 %v475, %v1485
        %v1515 = vmul.f32 %v476, %v1489
        %v1516 = vmul.f32 %v477, %v1485
        %v1517 = vmul.f32 %v478, %v1489
        %v1518 = vmul.f32 %v479, %v1485
        %v1519 = vmul.f32 %v480, %v1489
        %v1520 = vmul.f32 %v481, %v1485
        %v1521 = vmul.f32 %v482, %v1489
        %v1522 = vmul.f32 %v483, %v1485
        %v1523 = vmul.f32 %v484, %v1489
        %v1524 = vmul.f32 %v485, %v1485
        %v1525 = vmul.f32 %v486, %v1489
        %v1526 = vmul.f32 %v487, %v1485
        %v1527 = vmul.f32 %v488, %v1489
        %v1528 = vmul.f32 %v489, %v1485
        %v1529 = vmul.f32 %v490, %v1489
        %v1530 = vmul.f32 %v491, %v1485
        %v1531 = vmul.f32 %v492, %v1489
        %v1532 = vmul.f32 %v493, %v1485
        %v1533 = vmul.f32 %v494, %v1489
        %v1534 = vmul.f32 %v495, %v1485
        %v1535 = vmul.f32 %v496, %v1489
        %v1536 = vmul.f32 %v497, %v1485
        %v1537 = vmul.f32 %v498, %v1489
        %v1538 = vmul.f32 %v499, %v1485
        %v1539 = vmul.f32 %v500, %v1489
        %v1540 = vmul.f32 %v501, %v1485
        %v1541 = vmul.f32 %v502, %v1489
        %v1542 = vmul.f32 %v503, %v1485
        %v1543 = vmul.f32 %v504, %v1489
        %v1544 = vmul.f32 %v505, %v1485
        %v1545 = vmul.f32 %v506, %v1489
        %v1546 = vmul.f32 %v507, %v1485
        %v1547 = vmul.f32 %v508, %v1489
        %v1548 = vmul.f32 %v509, %v1485
        %v1549 = vmul.f32 %v510, %v1489
        %v1550 = vmul.f32 %v511, %v1485
        %v1551 = vmul.f32 %v512, %v1489
        %v1552 = vmul.f32 %v513, %v1485
        %v1553 = vmul.f32 %v514, %v1489
        %v1554 = vadd.f32 %v1418, %v1490
        %v1555 = vadd.f32 %v1419, %v1491
        %v1556 = vadd.f32 %v1420, %v1492
        %v1557 = vadd.f32 %v1421, %v1493
        %v1558 = vadd.f32 %v1422, %v1494
        %v1559 = vadd.f32 %v1423, %v1495
        %v1560 = vadd.f32 %v1424, %v1496
        %v1561 = vadd.f32 %v1425, %v1497
        %v1562 = vadd.f32 %v1426, %v1498
        %v1563 = vadd.f32 %v1427, %v1499
        %v1564 = vadd.f32 %v1428, %v1500
        %v1565 = vadd.f32 %v1429, %v1501
        %v1566 = vadd.f32 %v1430, %v1502
        %v1567 = vadd.f32 %v1431, %v1503
        %v1568 = vadd.f32 %v1432, %v1504
        %v1569 = vadd.f32 %v1433, %v1505
        %v1570 = vadd.f32 %v1434, %v1506
        %v1571 = vadd.f32 %v1435, %v1507
        %v1572 = vadd.f32 %v1436, %v1508
        %v1573 = vadd.f32 %v1437, %v1509
        %v1574 = vadd.f32 %v1438, %v1510
        %v1575 = vadd.f32 %v1439, %v1511
        %v1576 = vadd.f32 %v1440, %v1512
        %v1577 = vadd.f32 %v1441, %v1513
        %v1578 = vadd.f32 %v1442, %v1514
        %v1579 = vadd.f32 %v1443, %v1515
        %v1580 = vadd.f32 %v1444, %v1516
        %v1581 = vadd.f32 %v1445, %v1517
        %v1582 = vadd.f32 %v1446, %v1518
        %v1583 = vadd.f32 %v1447, %v1519
        %v1584 = vadd.f32 %v1448, %v1520
        %v1585 = vadd.f32 %v1449, %v1521
        %v1586 = vadd.f32 %v1450, %v1522
        %v1587 = vadd.f32 %v1451, %v1523
        %v1588 = vadd.f32 %v1452, %v1524
        %v1589 = vadd.f32 %v1453, %v1525
        %v1590 = vadd.f32 %v1454, %v1526
        %v1591 = vadd.f32 %v1455, %v1527
        %v1592 = vadd.f32 %v1456, %v1528
        %v1593 = vadd.f32 %v1457, %v1529
        %v1594 = vadd.f32 %v1458, %v1530
        %v1595 = vadd.f32 %v1459, %v1531
        %v1596 = vadd.f32 %v1460, %v1532
        %v1597 = vadd.f32 %v1461, %v1533
        %v1598 = vadd.f32 %v1462, %v1534
        %v1599 = vadd.f32 %v1463, %v1535
        %v1600 = vadd.f32 %v1464, %v1536
        %v1601 = vadd.f32 %v1465, %v1537
        %v1602 = vadd.f32 %v1466, %v1538
        %v1603 = vadd.f32 %v1467, %v1539
        %v1604 = vadd.f32 %v1468, %v1540
        %v1605 = vadd.f32 %v1469, %v1541
        %v1606 = vadd.f32 %v1470, %v1542
        %v1607 = vadd.f32 %v1471, %v1543
        %v1608 = vadd.f32 %v1472, %v1544
        %v1609 = vadd.f32 %v1473, %v1545
        %v1610 = vadd.f32 %v1474, %v1546
        %v1611 = vadd.f32 %v1475, %v1547
        %v1612 = vadd.f32 %v1476, %v1548
        %v1613 = vadd.f32 %v1477, %v1549
        %v1614 = vadd.f32 %v1478, %v1550
        %v1615 = vadd.f32 %v1479, %v1551
        %v1616 = vadd.f32 %v1480, %v1552
        %v1617 = vadd.f32 %v1481, %v1553
        %v1618 = vlaneseq
        %v1619 = vshrl.u32 %v1618, 7
        %v1620 = vsub.s32 2, %v1619
        %v1621 = vrot.slane %v986, %v1620
        %v1622 = vlaneseq
        %v1623 = vshrl.u32 %v1622, 7
        %v1624 = vsub.s32 2, %v1623
        %v1625 = vrot.slane %v987, %v1624
        %v1626 = vmul.f32 %v914, %v1621
        %v1627 = vmul.f32 %v915, %v1625
        %v1628 = vmul.f32 %v916, %v1621
        %v1629 = vmul.f32 %v917, %v1625
        %v1630 = vmul.f32 %v918, %v1621
        %v1631 = vmul.f32 %v919, %v1625
        %v1632 = vmul.f32 %v920, %v1621
        %v1633 = vmul.f32 %v921, %v1625
        %v1634 = vmul.f32 %v922, %v1621
        %v1635 = vmul.f32 %v923, %v1625
        %v1636 = vmul.f32 %v924, %v1621
        %v1637 = vmul.f32 %v925, %v1625
        %v1638 = vmul.f32 %v926, %v1621
        %v1639 = vmul.f32 %v927, %v1625
        %v1640 = vmul.f32 %v928, %v1621
        %v1641 = vmul.f32 %v929, %v1625
        %v1642 = vmul.f32 %v930, %v1621
        %v1643 = vmul.f32 %v931, %v1625
        %v1644 = vmul.f32 %v932, %v1621
        %v1645 = vmul.f32 %v933, %v1625
        %v1646 = vmul.f32 %v934, %v1621
        %v1647 = vmul.f32 %v935, %v1625
        %v1648 = vmul.f32 %v936, %v1621
        %v1649 = vmul.f32 %v937, %v1625
        %v1650 = vmul.f32 %v938, %v1621
        %v1651 = vmul.f32 %v939, %v1625
        %v1652 = vmul.f32 %v940, %v1621
        %v1653 = vmul.f32 %v941, %v1625
        %v1654 = vmul.f32 %v942, %v1621
        %v1655 = vmul.f32 %v943, %v1625
        %v1656 = vmul.f32 %v944, %v1621
        %v1657 = vmul.f32 %v945, %v1625
        %v1658 = vmul.f32 %v946, %v1621
        %v1659 = vmul.f32 %v947, %v1625
        %v1660 = vmul.f32 %v948, %v1621
        %v1661 = vmul.f32 %v949, %v1625
        %v1662 = vmul.f32 %v950, %v1621
        %v1663 = vmul.f32 %v951, %v1625
        %v1664 = vmul.f32 %v952, %v1621
        %v1665 = vmul.f32 %v953, %v1625
        %v1666 = vmul.f32 %v954, %v1621
        %v1667 = vmul.f32 %v955, %v1625
        %v1668 = vmul.f32 %v956, %v1621
        %v1669 = vmul.f32 %v957, %v1625
        %v1670 = vmul.f32 %v958, %v1621
        %v1671 = vmul.f32 %v959, %v1625
        %v1672 = vmul.f32 %v960, %v1621
        %v1673 = vmul.f32 %v961, %v1625
        %v1674 = vmul.f32 %v962, %v1621
        %v1675 = vmul.f32 %v963, %v1625
        %v1676 = vmul.f32 %v964, %v1621
        %v1677 = vmul.f32 %v965, %v1625
        %v1678 = vmul.f32 %v966, %v1621
        %v1679 = vmul.f32 %v967, %v1625
        %v1680 = vmul.f32 %v968, %v1621
        %v1681 = vmul.f32 %v969, %v1625
        %v1682 = vmul.f32 %v970, %v1621
        %v1683 = vmul.f32 %v971, %v1625
        %v1684 = vmul.f32 %v972, %v1621
        %v1685 = vmul.f32 %v973, %v1625
        %v1686 = vmul.f32 %v974, %v1621
        %v1687 = vmul.f32 %v975, %v1625
        %v1688 = vmul.f32 %v976, %v1621
        %v1689 = vmul.f32 %v977, %v1625
        %v1690 = vadd.f32 %v1554, %v1626
        %v1691 = vadd.f32 %v1555, %v1627
        %v1692 = vadd.f32 %v1556, %v1628
        %v1693 = vadd.f32 %v1557, %v1629
        %v1694 = vadd.f32 %v1558, %v1630
        %v1695 = vadd.f32 %v1559, %v1631
        %v1696 = vadd.f32 %v1560, %v1632
        %v1697 = vadd.f32 %v1561, %v1633
        %v1698 = vadd.f32 %v1562, %v1634
        %v1699 = vadd.f32 %v1563, %v1635
        %v1700 = vadd.f32 %v1564, %v1636
        %v1701 = vadd.f32 %v1565, %v1637
        %v1702 = vadd.f32 %v1566, %v1638
        %v1703 = vadd.f32 %v1567, %v1639
        %v1704 = vadd.f32 %v1568, %v1640
        %v1705 = vadd.f32 %v1569, %v1641
        %v1706 = vadd.f32 %v1570, %v1642
        %v1707 = vadd.f32 %v1571, %v1643
        %v1708 = vadd.f32 %v1572, %v1644
        %v1709 = vadd.f32 %v1573, %v1645
        %v1710 = vadd.f32 %v1574, %v1646
        %v1711 = vadd.f32 %v1575, %v1647
        %v1712 = vadd.f32 %v1576, %v1648
        %v1713 = vadd.f32 %v1577, %v1649
        %v1714 = vadd.f32 %v1578, %v1650
        %v1715 = vadd.f32 %v1579, %v1651
        %v1716 = vadd.f32 %v1580, %v1652
        %v1717 = vadd.f32 %v1581, %v1653
        %v1718 = vadd.f32 %v1582, %v1654
        %v1719 = vadd.f32 %v1583, %v1655
        %v1720 = vadd.f32 %v1584, %v1656
        %v1721 = vadd.f32 %v1585, %v1657
        %v1722 = vadd.f32 %v1586, %v1658
        %v1723 = vadd.f32 %v1587, %v1659
        %v1724 = vadd.f32 %v1588, %v1660
        %v1725 = vadd.f32 %v1589, %v1661
        %v1726 = vadd.f32 %v1590, %v1662
        %v1727 = vadd.f32 %v1591, %v1663
        %v1728 = vadd.f32 %v1592, %v1664
        %v1729 = vadd.f32 %v1593, %v1665
        %v1730 = vadd.f32 %v1594, %v1666
        %v1731 = vadd.f32 %v1595, %v1667
        %v1732 = vadd.f32 %v1596, %v1668
        %v1733 = vadd.f32 %v1597, %v1669
        %v1734 = vadd.f32 %v1598, %v1670
        %v1735 = vadd.f32 %v1599, %v1671
        %v1736 = vadd.f32 %v1600, %v1672
        %v1737 = vadd.f32 %v1601, %v1673
        %v1738 = vadd.f32 %v1602, %v1674
        %v1739 = vadd.f32 %v1603, %v1675
        %v1740 = vadd.f32 %v1604, %v1676
        %v1741 = vadd.f32 %v1605, %v1677
        %v1742 = vadd.f32 %v1606, %v1678
        %v1743 = vadd.f32 %v1607, %v1679
        %v1744 = vadd.f32 %v1608, %v1680
        %v1745 = vadd.f32 %v1609, %v1681
        %v1746 = vadd.f32 %v1610, %v1682
        %v1747 = vadd.f32 %v1611, %v1683
        %v1748 = vadd.f32 %v1612, %v1684
        %v1749 = vadd.f32 %v1613, %v1685
        %v1750 = vadd.f32 %v1614, %v1686
        %v1751 = vadd.f32 %v1615, %v1687
        %v1752 = vadd.f32 %v1616, %v1688
        %v1753 = vadd.f32 %v1617, %v1689
        %v1754 = vadd.f32 %v1346, %v1690
        %v1755 = vadd.f32 %v1347, %v1691
        %v1756 = vadd.f32 %v1348, %v1692
        %v1757 = vadd.f32 %v1349, %v1693
        %v1758 = vadd.f32 %v1350, %v1694
        %v1759 = vadd.f32 %v1351, %v1695
        %v1760 = vadd.f32 %v1352, %v1696
        %v1761 = vadd.f32 %v1353, %v1697
        %v1762 = vadd.f32 %v1354, %v1698
        %v1763 = vadd.f32 %v1355, %v1699
        %v1764 = vadd.f32 %v1356, %v1700
        %v1765 = vadd.f32 %v1357, %v1701
        %v1766 = vadd.f32 %v1358, %v1702
        %v1767 = vadd.f32 %v1359, %v1703
        %v1768 = vadd.f32 %v1360, %v1704
        %v1769 = vadd.f32 %v1361, %v1705
        %v1770 = vadd.f32 %v1362, %v1706
        %v1771 = vadd.f32 %v1363, %v1707
        %v1772 = vadd.f32 %v1364, %v1708
        %v1773 = vadd.f32 %v1365, %v1709
        %v1774 = vadd.f32 %v1366, %v1710
        %v1775 = vadd.f32 %v1367, %v1711
        %v1776 = vadd.f32 %v1368, %v1712
        %v1777 = vadd.f32 %v1369, %v1713
        %v1778 = vadd.f32 %v1370, %v1714
        %v1779 = vadd.f32 %v1371, %v1715
        %v1780 = vadd.f32 %v1372, %v1716
        %v1781 = vadd.f32 %v1373, %v1717
        %v1782 = vadd.f32 %v1374, %v1718
        %v1783 = vadd.f32 %v1375, %v1719
        %v1784 = vadd.f32 %v1376, %v1720
        %v1785 = vadd.f32 %v1377, %v1721
        %v1786 = vadd.f32 %v1378, %v1722
        %v1787 = vadd.f32 %v1379, %v1723
        %v1788 = vadd.f32 %v1380, %v1724
        %v1789 = vadd.f32 %v1381, %v1725
        %v1790 = vadd.f32 %v1382, %v1726
        %v1791 = vadd.f32 %v1383, %v1727
        %v1792 = vadd.f32 %v1384, %v1728
        %v1793 = vadd.f32 %v1385, %v1729
        %v1794 = vadd.f32 %v1386, %v1730
        %v1795 = vadd.f32 %v1387, %v1731
        %v1796 = vadd.f32 %v1388, %v1732
        %v1797 = vadd.f32 %v1389, %v1733
        %v1798 = vadd.f32 %v1390, %v1734
        %v1799 = vadd.f32 %v1391, %v1735
        %v1800 = vadd.f32 %v1392, %v1736
        %v1801 = vadd.f32 %v1393, %v1737
        %v1802 = vadd.f32 %v1394, %v1738
        %v1803 = vadd.f32 %v1395, %v1739
        %v1804 = vadd.f32 %v1396, %v1740
        %v1805 = vadd.f32 %v1397, %v1741
        %v1806 = vadd.f32 %v1398, %v1742
        %v1807 = vadd.f32 %v1399, %v1743
        %v1808 = vadd.f32 %v1400, %v1744
        %v1809 = vadd.f32 %v1401, %v1745
        %v1810 = vadd.f32 %v1402, %v1746
        %v1811 = vadd.f32 %v1403, %v1747
        %v1812 = vadd.f32 %v1404, %v1748
        %v1813 = vadd.f32 %v1405, %v1749
        %v1814 = vadd.f32 %v1406, %v1750
        %v1815 = vadd.f32 %v1407, %v1751
        %v1816 = vadd.f32 %v1408, %v1752
        %v1817 = vadd.f32 %v1409, %v1753
        %v1818 = vlaneseq
        %v1819 = vshrl.u32 %v1818, 7
        %v1820 = vsub.s32 6, %v1819
        %v1821 = vrot.slane %v986, %v1820
        %v1822 = vlaneseq
        %v1823 = vshrl.u32 %v1822, 7
        %v1824 = vsub.s32 6, %v1823
        %v1825 = vrot.slane %v987, %v1824
        %v1826 = vmul.f32 %v705, %v1821
        %v1827 = vmul.f32 %v706, %v1825
        %v1828 = vmul.f32 %v707, %v1821
        %v1829 = vmul.f32 %v708, %v1825
        %v1830 = vmul.f32 %v709, %v1821
        %v1831 = vmul.f32 %v710, %v1825
        %v1832 = vmul.f32 %v711, %v1821
        %v1833 = vmul.f32 %v712, %v1825
        %v1834 = vmul.f32 %v713, %v1821
        %v1835 = vmul.f32 %v714, %v1825
        %v1836 = vmul.f32 %v715, %v1821
        %v1837 = vmul.f32 %v716, %v1825
        %v1838 = vmul.f32 %v717, %v1821
        %v1839 = vmul.f32 %v718, %v1825
        %v1840 = vmul.f32 %v719, %v1821
        %v1841 = vmul.f32 %v720, %v1825
        %v1842 = vmul.f32 %v721, %v1821
        %v1843 = vmul.f32 %v722, %v1825
        %v1844 = vmul.f32 %v723, %v1821
        %v1845 = vmul.f32 %v724, %v1825
        %v1846 = vmul.f32 %v725, %v1821
        %v1847 = vmul.f32 %v726, %v1825
        %v1848 = vmul.f32 %v727, %v1821
        %v1849 = vmul.f32 %v728, %v1825
        %v1850 = vmul.f32 %v729, %v1821
        %v1851 = vmul.f32 %v730, %v1825
        %v1852 = vmul.f32 %v731, %v1821
        %v1853 = vmul.f32 %v732, %v1825
        %v1854 = vmul.f32 %v733, %v1821
        %v1855 = vmul.f32 %v734, %v1825
        %v1856 = vmul.f32 %v735, %v1821
        %v1857 = vmul.f32 %v736, %v1825
        %v1858 = vmul.f32 %v737, %v1821
        %v1859 = vmul.f32 %v738, %v1825
        %v1860 = vmul.f32 %v739, %v1821
        %v1861 = vmul.f32 %v740, %v1825
        %v1862 = vmul.f32 %v741, %v1821
        %v1863 = vmul.f32 %v742, %v1825
        %v1864 = vmul.f32 %v743, %v1821
        %v1865 = vmul.f32 %v744, %v1825
        %v1866 = vmul.f32 %v745, %v1821
        %v1867 = vmul.f32 %v746, %v1825
        %v1868 = vmul.f32 %v747, %v1821
        %v1869 = vmul.f32 %v748, %v1825
        %v1870 = vmul.f32 %v749, %v1821
        %v1871 = vmul.f32 %v750, %v1825
        %v1872 = vmul.f32 %v751, %v1821
        %v1873 = vmul.f32 %v752, %v1825
        %v1874 = vmul.f32 %v753, %v1821
        %v1875 = vmul.f32 %v754, %v1825
        %v1876 = vmul.f32 %v755, %v1821
        %v1877 = vmul.f32 %v756, %v1825
        %v1878 = vmul.f32 %v757, %v1821
        %v1879 = vmul.f32 %v758, %v1825
        %v1880 = vmul.f32 %v759, %v1821
        %v1881 = vmul.f32 %v760, %v1825
        %v1882 = vmul.f32 %v761, %v1821
        %v1883 = vmul.f32 %v762, %v1825
        %v1884 = vmul.f32 %v763, %v1821
        %v1885 = vmul.f32 %v764, %v1825
        %v1886 = vmul.f32 %v765, %v1821
        %v1887 = vmul.f32 %v766, %v1825
        %v1888 = vmul.f32 %v767, %v1821
        %v1889 = vmul.f32 %v768, %v1825
        %v1890 = vlaneseq
        %v1891 = vshrl.u32 %v1890, 7
        %v1892 = vsub.s32 7, %v1891
        %v1893 = vrot.slane %v986, %v1892
        %v1894 = vlaneseq
        %v1895 = vshrl.u32 %v1894, 7
        %v1896 = vsub.s32 7, %v1895
        %v1897 = vrot.slane %v987, %v1896
        %v1898 = vmul.f32 %v459, %v1893
        %v1899 = vmul.f32 %v460, %v1897
        %v1900 = vmul.f32 %v461, %v1893
        %v1901 = vmul.f32 %v462, %v1897
        %v1902 = vmul.f32 %v463, %v1893
        %v1903 = vmul.f32 %v464, %v1897
        %v1904 = vmul.f32 %v465, %v1893
        %v1905 = vmul.f32 %v466, %v1897
        %v1906 = vmul.f32 %v467, %v1893
        %v1907 = vmul.f32 %v468, %v1897
        %v1908 = vmul.f32 %v469, %v1893
        %v1909 = vmul.f32 %v470, %v1897
        %v1910 = vmul.f32 %v471, %v1893
        %v1911 = vmul.f32 %v472, %v1897
        %v1912 = vmul.f32 %v473, %v1893
        %v1913 = vmul.f32 %v474, %v1897
        %v1914 = vmul.f32 %v475, %v1893
        %v1915 = vmul.f32 %v476, %v1897
        %v1916 = vmul.f32 %v477, %v1893
        %v1917 = vmul.f32 %v478, %v1897
        %v1918 = vmul.f32 %v479, %v1893
        %v1919 = vmul.f32 %v480, %v1897
        %v1920 = vmul.f32 %v481, %v1893
        %v1921 = vmul.f32 %v482, %v1897
        %v1922 = vmul.f32 %v483, %v1893
        %v1923 = vmul.f32 %v484, %v1897
        %v1924 = vmul.f32 %v485, %v1893
        %v1925 = vmul.f32 %v486, %v1897
        %v1926 = vmul.f32 %v487, %v1893
        %v1927 = vmul.f32 %v488, %v1897
        %v1928 = vmul.f32 %v489, %v1893
        %v1929 = vmul.f32 %v490, %v1897
        %v1930 = vmul.f32 %v491, %v1893
        %v1931 = vmul.f32 %v492, %v1897
        %v1932 = vmul.f32 %v493, %v1893
        %v1933 = vmul.f32 %v494, %v1897
        %v1934 = vmul.f32 %v495, %v1893
        %v1935 = vmul.f32 %v496, %v1897
        %v1936 = vmul.f32 %v497, %v1893
        %v1937 = vmul.f32 %v498, %v1897
        %v1938 = vmul.f32 %v499, %v1893
        %v1939 = vmul.f32 %v500, %v1897
        %v1940 = vmul.f32 %v501, %v1893
        %v1941 = vmul.f32 %v502, %v1897
        %v1942 = vmul.f32 %v503, %v1893
        %v1943 = vmul.f32 %v504, %v1897
        %v1944 = vmul.f32 %v505, %v1893
        %v1945 = vmul.f32 %v506, %v1897
        %v1946 = vmul.f32 %v507, %v1893
        %v1947 = vmul.f32 %v508, %v1897
        %v1948 = vmul.f32 %v509, %v1893
        %v1949 = vmul.f32 %v510, %v1897
        %v1950 = vmul.f32 %v511, %v1893
        %v1951 = vmul.f32 %v512, %v1897
        %v1952 = vmul.f32 %v513, %v1893
        %v1953 = vmul.f32 %v514, %v1897
        %v1954 = vmul.f32 %v515, %v1893
        %v1955 = vmul.f32 %v516, %v1897
        %v1956 = vmul.f32 %v517, %v1893
        %v1957 = vmul.f32 %v518, %v1897
        %v1958 = vmul.f32 %v533, %v1893
        %v1959 = vmul.f32 %v534, %v1897
        %v1960 = vmul.f32 %v535, %v1893
        %v1961 = vmul.f32 %v536, %v1897
        %v1962 = vadd.f32 %v1826, %v1898
        %v1963 = vadd.f32 %v1827, %v1899
        %v1964 = vadd.f32 %v1828, %v1900
        %v1965 = vadd.f32 %v1829, %v1901
        %v1966 = vadd.f32 %v1830, %v1902
        %v1967 = vadd.f32 %v1831, %v1903
        %v1968 = vadd.f32 %v1832, %v1904
        %v1969 = vadd.f32 %v1833, %v1905
        %v1970 = vadd.f32 %v1834, %v1906
        %v1971 = vadd.f32 %v1835, %v1907
        %v1972 = vadd.f32 %v1836, %v1908
        %v1973 = vadd.f32 %v1837, %v1909
        %v1974 = vadd.f32 %v1838, %v1910
        %v1975 = vadd.f32 %v1839, %v1911
        %v1976 = vadd.f32 %v1840, %v1912
        %v1977 = vadd.f32 %v1841, %v1913
        %v1978 = vadd.f32 %v1842, %v1914
        %v1979 = vadd.f32 %v1843, %v1915
        %v1980 = vadd.f32 %v1844, %v1916
        %v1981 = vadd.f32 %v1845, %v1917
        %v1982 = vadd.f32 %v1846, %v1918
        %v1983 = vadd.f32 %v1847, %v1919
        %v1984 = vadd.f32 %v1848, %v1920
        %v1985 = vadd.f32 %v1849, %v1921
        %v1986 = vadd.f32 %v1850, %v1922
        %v1987 = vadd.f32 %v1851, %v1923
        %v1988 = vadd.f32 %v1852, %v1924
        %v1989 = vadd.f32 %v1853, %v1925
        %v1990 = vadd.f32 %v1854, %v1926
        %v1991 = vadd.f32 %v1855, %v1927
        %v1992 = vadd.f32 %v1856, %v1928
        %v1993 = vadd.f32 %v1857, %v1929
        %v1994 = vadd.f32 %v1858, %v1930
        %v1995 = vadd.f32 %v1859, %v1931
        %v1996 = vadd.f32 %v1860, %v1932
        %v1997 = vadd.f32 %v1861, %v1933
        %v1998 = vadd.f32 %v1862, %v1934
        %v1999 = vadd.f32 %v1863, %v1935
        %v2000 = vadd.f32 %v1864, %v1936
        %v2001 = vadd.f32 %v1865, %v1937
        %v2002 = vadd.f32 %v1866, %v1938
        %v2003 = vadd.f32 %v1867, %v1939
        %v2004 = vadd.f32 %v1868, %v1940
        %v2005 = vadd.f32 %v1869, %v1941
        %v2006 = vadd.f32 %v1870, %v1942
        %v2007 = vadd.f32 %v1871, %v1943
        %v2008 = vadd.f32 %v1872, %v1944
        %v2009 = vadd.f32 %v1873, %v1945
        %v2010 = vadd.f32 %v1874, %v1946
        %v2011 = vadd.f32 %v1875, %v1947
        %v2012 = vadd.f32 %v1876, %v1948
        %v2013 = vadd.f32 %v1877, %v1949
        %v2014 = vadd.f32 %v1878, %v1950
        %v2015 = vadd.f32 %v1879, %v1951
        %v2016 = vadd.f32 %v1880, %v1952
        %v2017 = vadd.f32 %v1881, %v1953
        %v2018 = vadd.f32 %v1882, %v1954
        %v2019 = vadd.f32 %v1883, %v1955
        %v2020 = vadd.f32 %v1884, %v1956
        %v2021 = vadd.f32 %v1885, %v1957
        %v2022 = vadd.f32 %v1886, %v1958
        %v2023 = vadd.f32 %v1887, %v1959
        %v2024 = vadd.f32 %v1888, %v1960
        %v2025 = vadd.f32 %v1889, %v1961
        %v2026 = vlaneseq
        %v2027 = vshrl.u32 %v2026, 7
        %v2028 = vsub.s32 0, %v2027
        %v2029 = vrot.slane %v988, %v2028
        %v2030 = vlaneseq
        %v2031 = vshrl.u32 %v2030, 7
        %v2032 = vsub.s32 0, %v2031
        %v2033 = vrot.slane %v989, %v2032
        %v2034 = vmul.f32 %v922, %v2029
        %v2035 = vmul.f32 %v923, %v2033
        %v2036 = vmul.f32 %v924, %v2029
        %v2037 = vmul.f32 %v925, %v2033
        %v2038 = vmul.f32 %v926, %v2029
        %v2039 = vmul.f32 %v927, %v2033
        %v2040 = vmul.f32 %v928, %v2029
        %v2041 = vmul.f32 %v929, %v2033
        %v2042 = vmul.f32 %v930, %v2029
        %v2043 = vmul.f32 %v931, %v2033
        %v2044 = vmul.f32 %v932, %v2029
        %v2045 = vmul.f32 %v933, %v2033
        %v2046 = vmul.f32 %v934, %v2029
        %v2047 = vmul.f32 %v935, %v2033
        %v2048 = vmul.f32 %v936, %v2029
        %v2049 = vmul.f32 %v937, %v2033
        %v2050 = vmul.f32 %v938, %v2029
        %v2051 = vmul.f32 %v939, %v2033
        %v2052 = vmul.f32 %v940, %v2029
        %v2053 = vmul.f32 %v941, %v2033
        %v2054 = vmul.f32 %v942, %v2029
        %v2055 = vmul.f32 %v943, %v2033
        %v2056 = vmul.f32 %v944, %v2029
        %v2057 = vmul.f32 %v945, %v2033
        %v2058 = vmul.f32 %v946, %v2029
        %v2059 = vmul.f32 %v947, %v2033
        %v2060 = vmul.f32 %v948, %v2029
        %v2061 = vmul.f32 %v949, %v2033
        %v2062 = vmul.f32 %v950, %v2029
        %v2063 = vmul.f32 %v951, %v2033
        %v2064 = vmul.f32 %v952, %v2029
        %v2065 = vmul.f32 %v953, %v2033
        %v2066 = vmul.f32 %v954, %v2029
        %v2067 = vmul.f32 %v955, %v2033
        %v2068 = vmul.f32 %v956, %v2029
        %v2069 = vmul.f32 %v957, %v2033
        %v2070 = vmul.f32 %v958, %v2029
        %v2071 = vmul.f32 %v959, %v2033
        %v2072 = vmul.f32 %v960, %v2029
        %v2073 = vmul.f32 %v961, %v2033
        %v2074 = vmul.f32 %v962, %v2029
        %v2075 = vmul.f32 %v963, %v2033
        %v2076 = vmul.f32 %v964, %v2029
        %v2077 = vmul.f32 %v965, %v2033
        %v2078 = vmul.f32 %v966, %v2029
        %v2079 = vmul.f32 %v967, %v2033
        %v2080 = vmul.f32 %v968, %v2029
        %v2081 = vmul.f32 %v969, %v2033
        %v2082 = vmul.f32 %v970, %v2029
        %v2083 = vmul.f32 %v971, %v2033
        %v2084 = vmul.f32 %v972, %v2029
        %v2085 = vmul.f32 %v973, %v2033
        %v2086 = vmul.f32 %v974, %v2029
        %v2087 = vmul.f32 %v975, %v2033
        %v2088 = vmul.f32 %v976, %v2029
        %v2089 = vmul.f32 %v977, %v2033
        %v2090 = vmul.f32 %v978, %v2029
        %v2091 = vmul.f32 %v979, %v2033
        %v2092 = vmul.f32 %v980, %v2029
        %v2093 = vmul.f32 %v981, %v2033
        %v2094 = vmul.f32 %v982, %v2029
        %v2095 = vmul.f32 %v983, %v2033
        %v2096 = vmul.f32 %v984, %v2029
        %v2097 = vmul.f32 %v985, %v2033
        %v2098 = vadd.f32 %v1962, %v2034
        %v2099 = vadd.f32 %v1963, %v2035
        %v2100 = vadd.f32 %v1964, %v2036
        %v2101 = vadd.f32 %v1965, %v2037
        %v2102 = vadd.f32 %v1966, %v2038
        %v2103 = vadd.f32 %v1967, %v2039
        %v2104 = vadd.f32 %v1968, %v2040
        %v2105 = vadd.f32 %v1969, %v2041
        %v2106 = vadd.f32 %v1970, %v2042
        %v2107 = vadd.f32 %v1971, %v2043
        %v2108 = vadd.f32 %v1972, %v2044
        %v2109 = vadd.f32 %v1973, %v2045
        %v2110 = vadd.f32 %v1974, %v2046
        %v2111 = vadd.f32 %v1975, %v2047
        %v2112 = vadd.f32 %v1976, %v2048
        %v2113 = vadd.f32 %v1977, %v2049
        %v2114 = vadd.f32 %v1978, %v2050
        %v2115 = vadd.f32 %v1979, %v2051
        %v2116 = vadd.f32 %v1980, %v2052
        %v2117 = vadd.f32 %v1981, %v2053
        %v2118 = vadd.f32 %v1982, %v2054
        %v2119 = vadd.f32 %v1983, %v2055
        %v2120 = vadd.f32 %v1984, %v2056
        %v2121 = vadd.f32 %v1985, %v2057
        %v2122 = vadd.f32 %v1986, %v2058
        %v2123 = vadd.f32 %v1987, %v2059
        %v2124 = vadd.f32 %v1988, %v2060
        %v2125 = vadd.f32 %v1989, %v2061
        %v2126 = vadd.f32 %v1990, %v2062
        %v2127 = vadd.f32 %v1991, %v2063
        %v2128 = vadd.f32 %v1992, %v2064
        %v2129 = vadd.f32 %v1993, %v2065
        %v2130 = vadd.f32 %v1994, %v2066
        %v2131 = vadd.f32 %v1995, %v2067
        %v2132 = vadd.f32 %v1996, %v2068
        %v2133 = vadd.f32 %v1997, %v2069
        %v2134 = vadd.f32 %v1998, %v2070
        %v2135 = vadd.f32 %v1999, %v2071
        %v2136 = vadd.f32 %v2000, %v2072
        %v2137 = vadd.f32 %v2001, %v2073
        %v2138 = vadd.f32 %v2002, %v2074
        %v2139 = vadd.f32 %v2003, %v2075
        %v2140 = vadd.f32 %v2004, %v2076
        %v2141 = vadd.f32 %v2005, %v2077
        %v2142 = vadd.f32 %v2006, %v2078
        %v2143 = vadd.f32 %v2007, %v2079
        %v2144 = vadd.f32 %v2008, %v2080
        %v2145 = vadd.f32 %v2009, %v2081
        %v2146 = vadd.f32 %v2010, %v2082
        %v2147 = vadd.f32 %v2011, %v2083
        %v2148 = vadd.f32 %v2012, %v2084
        %v2149 = vadd.f32 %v2013, %v2085
        %v2150 = vadd.f32 %v2014, %v2086
        %v2151 = vadd.f32 %v2015, %v2087
        %v2152 = vadd.f32 %v2016, %v2088
        %v2153 = vadd.f32 %v2017, %v2089
        %v2154 = vadd.f32 %v2018, %v2090
        %v2155 = vadd.f32 %v2019, %v2091
        %v2156 = vadd.f32 %v2020, %v2092
        %v2157 = vadd.f32 %v2021, %v2093
        %v2158 = vadd.f32 %v2022, %v2094
        %v2159 = vadd.f32 %v2023, %v2095
        %v2160 = vadd.f32 %v2024, %v2096
        %v2161 = vadd.f32 %v2025, %v2097
        %v2162 = vadd.f32 %v1754, %v2098
        %v2163 = vadd.f32 %v1755, %v2099
        %v2164 = vadd.f32 %v1756, %v2100
        %v2165 = vadd.f32 %v1757, %v2101
        %v2166 = vadd.f32 %v1758, %v2102
        %v2167 = vadd.f32 %v1759, %v2103
        %v2168 = vadd.f32 %v1760, %v2104
        %v2169 = vadd.f32 %v1761, %v2105
        %v2170 = vadd.f32 %v1762, %v2106
        %v2171 = vadd.f32 %v1763, %v2107
        %v2172 = vadd.f32 %v1764, %v2108
        %v2173 = vadd.f32 %v1765, %v2109
        %v2174 = vadd.f32 %v1766, %v2110
        %v2175 = vadd.f32 %v1767, %v2111
        %v2176 = vadd.f32 %v1768, %v2112
        %v2177 = vadd.f32 %v1769, %v2113
        %v2178 = vadd.f32 %v1770, %v2114
        %v2179 = vadd.f32 %v1771, %v2115
        %v2180 = vadd.f32 %v1772, %v2116
        %v2181 = vadd.f32 %v1773, %v2117
        %v2182 = vadd.f32 %v1774, %v2118
        %v2183 = vadd.f32 %v1775, %v2119
        %v2184 = vadd.f32 %v1776, %v2120
        %v2185 = vadd.f32 %v1777, %v2121
        %v2186 = vadd.f32 %v1778, %v2122
        %v2187 = vadd.f32 %v1779, %v2123
        %v2188 = vadd.f32 %v1780, %v2124
        %v2189 = vadd.f32 %v1781, %v2125
        %v2190 = vadd.f32 %v1782, %v2126
        %v2191 = vadd.f32 %v1783, %v2127
        %v2192 = vadd.f32 %v1784, %v2128
        %v2193 = vadd.f32 %v1785, %v2129
        %v2194 = vadd.f32 %v1786, %v2130
        %v2195 = vadd.f32 %v1787, %v2131
        %v2196 = vadd.f32 %v1788, %v2132
        %v2197 = vadd.f32 %v1789, %v2133
        %v2198 = vadd.f32 %v1790, %v2134
        %v2199 = vadd.f32 %v1791, %v2135
        %v2200 = vadd.f32 %v1792, %v2136
        %v2201 = vadd.f32 %v1793, %v2137
        %v2202 = vadd.f32 %v1794, %v2138
        %v2203 = vadd.f32 %v1795, %v2139
        %v2204 = vadd.f32 %v1796, %v2140
        %v2205 = vadd.f32 %v1797, %v2141
        %v2206 = vadd.f32 %v1798, %v2142
        %v2207 = vadd.f32 %v1799, %v2143
        %v2208 = vadd.f32 %v1800, %v2144
        %v2209 = vadd.f32 %v1801, %v2145
        %v2210 = vadd.f32 %v1802, %v2146
        %v2211 = vadd.f32 %v1803, %v2147
        %v2212 = vadd.f32 %v1804, %v2148
        %v2213 = vadd.f32 %v1805, %v2149
        %v2214 = vadd.f32 %v1806, %v2150
        %v2215 = vadd.f32 %v1807, %v2151
        %v2216 = vadd.f32 %v1808, %v2152
        %v2217 = vadd.f32 %v1809, %v2153
        %v2218 = vadd.f32 %v1810, %v2154
        %v2219 = vadd.f32 %v1811, %v2155
        %v2220 = vadd.f32 %v1812, %v2156
        %v2221 = vadd.f32 %v1813, %v2157
        %v2222 = vadd.f32 %v1814, %v2158
        %v2223 = vadd.f32 %v1815, %v2159
        %v2224 = vadd.f32 %v1816, %v2160
        %v2225 = vadd.f32 %v1817, %v2161
        %2226 = vst [vmem:[%s428] sm:$0xff] %v2162
        %2227 = vst [vmem:[%s428 + $0x8] sm:$0xff] %v2163
        %2228 = vst [vmem:[%s428 + $0x10] sm:$0xff] %v2164
        %2229 = vst [vmem:[%s428 + $0x18] sm:$0xff] %v2165
        %2230 = vst [vmem:[%s428 + $0x20] sm:$0xff] %v2166
        %2231 = vst [vmem:[%s428 + $0x28] sm:$0xff] %v2167
        %2232 = vst [vmem:[%s428 + $0x30] sm:$0xff] %v2168
        %2233 = vst [vmem:[%s428 + $0x38] sm:$0xff] %v2169
        %2234 = vst [vmem:[%s428 + $0x40] sm:$0xff] %v2170
        %2235 = vst [vmem:[%s428 + $0x48] sm:$0xff] %v2171
        %2236 = vst [vmem:[%s428 + $0x50] sm:$0xff] %v2172
        %2237 = vst [vmem:[%s428 + $0x58] sm:$0xff] %v2173
        %2238 = vst [vmem:[%s428 + $0x60] sm:$0xff] %v2174
        %2239 = vst [vmem:[%s428 + $0x68] sm:$0xff] %v2175
        %2240 = vst [vmem:[%s428 + $0x70] sm:$0xff] %v2176
        %2241 = vst [vmem:[%s428 + $0x78] sm:$0xff] %v2177
        %2242 = vst [vmem:[%s428 + $0x80] sm:$0xff] %v2178
        %2243 = vst [vmem:[%s428 + $0x88] sm:$0xff] %v2179
        %2244 = vst [vmem:[%s428 + $0x90] sm:$0xff] %v2180
        %2245 = vst [vmem:[%s428 + $0x98] sm:$0xff] %v2181
        %2246 = vst [vmem:[%s428 + $0xa0] sm:$0xff] %v2182
        %2247 = vst [vmem:[%s428 + $0xa8] sm:$0xff] %v2183
        %2248 = vst [vmem:[%s428 + $0xb0] sm:$0xff] %v2184
        %2249 = vst [vmem:[%s428 + $0xb8] sm:$0xff] %v2185
        %2250 = vst [vmem:[%s428 + $0xc0] sm:$0xff] %v2186
        %2251 = vst [vmem:[%s428 + $0xc8] sm:$0xff] %v2187
        %2252 = vst [vmem:[%s428 + $0xd0] sm:$0xff] %v2188
        %2253 = vst [vmem:[%s428 + $0xd8] sm:$0xff] %v2189
        %2254 = vst [vmem:[%s428 + $0xe0] sm:$0xff] %v2190
        %2255 = vst [vmem:[%s428 + $0xe8] sm:$0xff] %v2191
        %2256 = vst [vmem:[%s428 + $0xf0] sm:$0xff] %v2192
        %2257 = vst [vmem:[%s428 + $0xf8] sm:$0xff] %v2193
        %2258 = vst [vmem:[%s428 + $0x100] sm:$0xff] %v2194
        %2259 = vst [vmem:[%s428 + $0x108] sm:$0xff] %v2195
        %2260 = vst [vmem:[%s428 + $0x110] sm:$0xff] %v2196
        %2261 = vst [vmem:[%s428 + $0x118] sm:$0xff] %v2197
        %2262 = vst [vmem:[%s428 + $0x120] sm:$0xff] %v2198
        %2263 = vst [vmem:[%s428 + $0x128] sm:$0xff] %v2199
        %2264 = vst [vmem:[%s428 + $0x130] sm:$0xff] %v2200
        %2265 = vst [vmem:[%s428 + $0x138] sm:$0xff] %v2201
        %2266 = vst [vmem:[%s428 + $0x140] sm:$0xff] %v2202
        %2267 = vst [vmem:[%s428 + $0x148] sm:$0xff] %v2203
        %2268 = vst [vmem:[%s428 + $0x150] sm:$0xff] %v2204
        %2269 = vst [vmem:[%s428 + $0x158] sm:$0xff] %v2205
        %2270 = vst [vmem:[%s428 + $0x160] sm:$0xff] %v2206
        %2271 = vst [vmem:[%s428 + $0x168] sm:$0xff] %v2207
        %2272 = vst [vmem:[%s428 + $0x170] sm:$0xff] %v2208
        %2273 = vst [vmem:[%s428 + $0x178] sm:$0xff] %v2209
        %2274 = vst [vmem:[%s428 + $0x180] sm:$0xff] %v2210
        %2275 = vst [vmem:[%s428 + $0x188] sm:$0xff] %v2211
        %2276 = vst [vmem:[%s428 + $0x190] sm:$0xff] %v2212
        %2277 = vst [vmem:[%s428 + $0x198] sm:$0xff] %v2213
        %2278 = vst [vmem:[%s428 + $0x1a0] sm:$0xff] %v2214
        %2279 = vst [vmem:[%s428 + $0x1a8] sm:$0xff] %v2215
        %2280 = vst [vmem:[%s428 + $0x1b0] sm:$0xff] %v2216
        %2281 = vst [vmem:[%s428 + $0x1b8] sm:$0xff] %v2217
        %2282 = vst [vmem:[%s428 + $0x1c0] sm:$0xff] %v2218
        %2283 = vst [vmem:[%s428 + $0x1c8] sm:$0xff] %v2219
        %2284 = vst [vmem:[%s428 + $0x1d0] sm:$0xff] %v2220
        %2285 = vst [vmem:[%s428 + $0x1d8] sm:$0xff] %v2221
        %2286 = vst [vmem:[%s428 + $0x1e0] sm:$0xff] %v2222
        %2287 = vst [vmem:[%s428 + $0x1e8] sm:$0xff] %v2223
        %2288 = vst [vmem:[%s428 + $0x1f0] sm:$0xff] %v2224
        %2289 = vst [vmem:[%s428 + $0x1f8] sm:$0xff] %v2225
        %s2290 = sand.u32 %s215, 1
        %s2291 = scalar_lea.sflag [#allocation4], %s2290
        %s2292 = sand.u32 %s215, 1
        %s2293 = smul.addr %s2292, 512
        %s2294 = scalar_lea.vmem [#allocation10], %s2293
        // Predicated region
        $region57: #{tpu_custom_call.1} parent=39 // pred_check
          %p2295 = pneg %p225
        $region58: #{tpu_custom_call.1} parent=39 // pred_check_branch
          %2297 = sbr.rel (%p2295) target = $region60
        $region59: #{tpu_custom_call.1} parent=39 // pred_region
          %s2298 = smul.u32 16, %s33
          %s2299 = smul.u32 2, %s31
          %s2301 = ssub.s32 8192, 8192
          %2302 = vsyncadd %s2291, %s2301
          %s2303 = smul.addr %s2298, 4
          %s2304 = sadd.s32 %s2299, %s2303
          %s2305 = smul.addr %s32, 64
          %s2306 = sadd.s32 %s2304, %s2305
          %s2307 = smul.addr %s2306, 128
          %s2308 = scalar_lea.hbm %s5, %s2307
          %s2309 = sshll.u32 %s2294, 4
          %s2310 = int_to_ptr.vmem [resolvable:$true] %s2309
          %2315 = dma.vmem_to_hbm [thread:$0]  %s2310, 8192, %s2308, %s2291, 256, 256, 16
        $region60: #{tpu_custom_call.1} parent=39 // pred_fallthru
          _
      $region40: #{tpu_custom_call.1} parent=5 // pred_fallthru
        _
      %p2316 = scmp.le.s32.totalorder 2, %s21
      // Predicated region
      $region61: #{tpu_custom_call.1} parent=5 // pred_check
        %p2317 = pneg %p2316
      $region62: #{tpu_custom_call.1} parent=5 // pred_check_branch
        %2319 = sbr.rel (%p2317) target = $region64
      $region63: #{tpu_custom_call.1} parent=5 // pred_region
        %s2320 = ssub.s32 %s21, 2
        // Predicated region
        $region65: #{tpu_custom_call.1} parent=63 // pred_check
          %p2321 = pneg %p231
        $region66: #{tpu_custom_call.1} parent=63 // pred_check_branch
          %2323 = sbr.rel (%p2321) target = $region68
        $region67: #{tpu_custom_call.1} parent=63 // pred_region
          %s2324 = sand.u32 %s216, 1
          %s2325 = scalar_lea.sflag [#allocation4], %s2324
          %s2326 = sand.u32 %s216, 1
          %s2327 = smul.addr %s2326, 512
          %s2328 = scalar_lea.vmem [#allocation10], %s2327
          %2329 = dma.done %s2325, 8192
        $region68: #{tpu_custom_call.1} parent=63 // pred_fallthru
          _
      $region64: #{tpu_custom_call.1} parent=5 // pred_fallthru
        _
    $region6: #{tpu_custom_call.1} parent=1 // loop_footer
      %s25 = sadd.s32 1, %s21
    $region7: #{tpu_custom_call.1} parent=1 // loop_footer_branch
      %20 = sbr.rel target = $region3
    $region8: #{tpu_custom_call.1} parent=1 // loop_exit
      _
    %2330 = vsyncpa [#allocation3], 1
    %s2331 = scalar_lea.sflag [#allocation3], 1
    %2332 = vsyncpa %s2331, 1
    %2333 = vsyncpa [#allocation6], 1
    %s2334 = scalar_lea.sflag [#allocation6], 1
    %2335 = vsyncpa %s2334, 1
    %2336 = vsyncpa [#allocation9], 1
    %2337 = vsyncpa [#allocation4], 1
    %s2338 = scalar_lea.sflag [#allocation4], 1
    %2339 = vsyncpa %s2338, 1

</llo_original>
